<compile_context>
chip_gen: v7x
topology: tpu7x:2x2x1
jax: 0.10.0
libtpu: 0.0.40
codegen_flags: <defaults>
</compile_context>

<pallas_src>
import math

import jax
import jax.numpy as jnp
from jax.experimental import pallas as pl
from jax.experimental.pallas import tpu as pltpu


def _round_up(n, m):
    return ((n + m - 1) // m) * m


def _vae_kernel(x_ref, ew1_ref, eb1_ref, wh_ref, bh_ref, eps_ref,
                dw1_ref, db1_ref, dw2_ref, db2_ref,
                latent_ref, y_ref):
    f32 = jnp.float32

    # ---- Encoder MLP block: Linear + Tanh (f32 accumulate, f32 elementwise) ----
    x = x_ref[...]                                   # already compute_dtype
    h = jnp.tanh(
        jnp.dot(x, ew1_ref[...], preferred_element_type=f32) + eb1_ref[...])

    # ---- Fused encoder heads: one (H, 2L) matmul -> [mu | logvar] ----
    head = (jnp.dot(h.astype(wh_ref.dtype), wh_ref[...],
                    preferred_element_type=f32) + bh_ref[...])
    L = eps_ref.shape[-1]
    mu = head[:, :L]
    lv = head[:, L:]

    # ---- Stochastic layer (reparameterization trick), f32 ----
    z = jnp.exp(0.5 * lv) * eps_ref[...] + mu

    # ---- Decoder MLP block: Linear + Tanh ----
    hd = jnp.tanh(
        jnp.dot(z.astype(dw1_ref.dtype), dw1_ref[...],
                preferred_element_type=f32) + db1_ref[...])

    # ---- Decoder last layer: Linear + Sigmoid ----
    logits = (jnp.dot(hd.astype(dw2_ref.dtype), dw2_ref[...],
                      preferred_element_type=f32) + db2_ref[...])
    y_ref[...] = jax.nn.sigmoid(logits)

    # ---- Lane-dense packed latent output: [mu | lv | z | 0-pad] -> one
    #      unmasked 128-lane store instead of three masked 32-lane stores. ----
    packed = jnp.concatenate([mu, lv, z], axis=-1)
    pad = latent_ref.shape[-1] - packed.shape[-1]
    if pad:
        packed = jnp.concatenate(
            [packed, jnp.zeros((packed.shape[0], pad), f32)], axis=-1)
    latent_ref[...] = packed


def vae_forward_pallas(x, eps, params, *, batch_tile=128,
                       compute_dtype=jnp.bfloat16):
    """Run the fused VAE forward kernel.

    x:      (B, D_in) float32
    eps:    (B, L) float32  standard-normal noise (reparameterization)
    params: dict of weights stored as (in, out) and biases as (1, out)
    compute_dtype: MXU input dtype (bf16 default for v6e/v7x; pass jnp.float32
                   for bit-tight comparisons). Accumulation/elementwise are f32.
    returns (mu, logvariance, z, y), all float32 with batch B.
    """
    B, D_in = x.shape
    L = params["wmu"].shape[1]
    H_enc = params["ew1"].shape[1]
    H_dec = params["dw1"].shape[1]
    D_out = params["dw2"].shape[1]

    # Fused mu/logvar head weights.
    w_head = jnp.concatenate([params["wmu"], params["wlv"]], axis=1)   # (H, 2L)
    b_head = jnp.concatenate([params["bmu"], params["blv"]], axis=1)   # (1, 2L)

    # MXU inputs in compute_dtype; biases stay f32 (added post-accumulate).
    cd = compute_dtype
    ew1 = params["ew1"].astype(cd)
    w_head_c = w_head.astype(cd)
    dw1 = params["dw1"].astype(cd)
    dw2 = params["dw2"].astype(cd)
    xc = x.astype(cd)

    # Batch tiling: big tiles fill the MXU M dimension and amortize the
    # ~0.35us per-grid-step pipeline overhead.  Pad B up to a tile multiple.
    batch_tile = _round_up(max(batch_tile, 8), 8)
    tb = min(batch_tile, _round_up(B, 8))
    B_pad = _round_up(B, tb)
    if B_pad != B:
        xc = jnp.pad(xc, ((0, B_pad - B), (0, 0)))
        eps = jnp.pad(eps, ((0, B_pad - B), (0, 0)))
    grid = (B_pad // tb,)

    LAT = _round_up(3 * L, 128)    # lane-dense packed (mu | lv | z) slab width

    def tiled(cols):
        return pl.BlockSpec((tb, cols), lambda i: (i, 0))

    def full(arr):
        # Whole parameter resident; constant block index so the pipeliner does
        # not re-fetch it across grid steps.
        return pl.BlockSpec(arr.shape, lambda i: (0, 0))

    in_specs = [
        tiled(D_in),                       # x
        full(ew1), full(params["eb1"]),    # encoder mlp block
        full(w_head_c), full(b_head),      # fused mu|logvar head
        tiled(L),                          # eps
        full(dw1), full(params["db1"]),    # decoder mlp block
        full(dw2), full(params["db2"]),    # decoder last layer
    ]
    out_specs = [
        tiled(LAT),        # packed (mu | logvar | z | pad)
        tiled(D_out),      # y
    ]
    out_shape = [
        jax.ShapeDtypeStruct((B_pad, LAT), jnp.float32),
        jax.ShapeDtypeStruct((B_pad, D_out), jnp.float32),
    ]

    # Advisory cost estimate for the XLA scheduler.
    flops = 2 * B_pad * (D_in * H_enc + H_enc * 2 * L + L * H_dec
                         + H_dec * D_out)
    transcendentals = B_pad * (H_enc + H_dec + L + D_out)
    param_arrays = (ew1, params["eb1"], w_head_c, b_head,
                    dw1, params["db1"], dw2, params["db2"])
    bytes_accessed = (
        xc.size * xc.dtype.itemsize
        + eps.size * eps.dtype.itemsize
        + sum(a.size * a.dtype.itemsize for a in param_arrays)
        + B_pad * (LAT + D_out) * 4)

    latent, y = pl.pallas_call(
        _vae_kernel,
        out_shape=out_shape,
        grid_spec=pltpu.PrefetchScalarGridSpec(
            num_scalar_prefetch=0,
            grid=grid,
            in_specs=in_specs,
            out_specs=out_specs,
        ),
        compiler_params=pltpu.CompilerParams(
            dimension_semantics=("parallel",)),
        cost_estimate=pl.CostEstimate(
            flops=int(flops),
            transcendentals=int(transcendentals),
            bytes_accessed=int(bytes_accessed)),
    )(xc, ew1, params["eb1"], w_head_c, b_head, eps,
      dw1, params["db1"], dw2, params["db2"])

    mu = latent[:B, :L]
    lv = latent[:B, L:2 * L]
    z = latent[:B, 2 * L:3 * L]
    return mu, lv, z, y[:B]


def init_params(key, enc_sizes, dec_sizes):
    """PyTorch-Linear-style init (U[-1/sqrt(fan_in), 1/sqrt(fan_in)]).

    Weights returned transposed to (in_features, out_features); biases (1, out).
    """
    def linear(key, fan_in, fan_out):
        kw, kb = jax.random.split(key)
        bound = 1.0 / math.sqrt(fan_in)
        w = jax.random.uniform(kw, (fan_in, fan_out), jnp.float32, -bound, bound)
        b = jax.random.uniform(kb, (1, fan_out), jnp.float32, -bound, bound)
        return w, b

    keys = jax.random.split(key, 5)
    params = {}
    # encoder: one mlp_block (Linear + Tanh), then fc_mu / fc_logvariance
    params["ew1"], params["eb1"] = linear(keys[0], enc_sizes[0], enc_sizes[1])
    params["wmu"], params["bmu"] = linear(keys[1], enc_sizes[1], enc_sizes[2])
    params["wlv"], params["blv"] = linear(keys[2], enc_sizes[1], enc_sizes[2])
    # decoder: one mlp_block (Linear + Tanh), then last Linear + Sigmoid
    params["dw1"], params["db1"] = linear(keys[3], dec_sizes[0], dec_sizes[1])
    params["dw2"], params["db2"] = linear(keys[4], dec_sizes[1], dec_sizes[2])
    return params


def vae_forward_ref(x, eps, p):
    """Pure-JAX f32 reference of the same forward (for correctness checking)."""
    h = jnp.tanh(x @ p["ew1"] + p["eb1"])
    mu = h @ p["wmu"] + p["bmu"]
    lv = h @ p["wlv"] + p["blv"]
    z = jnp.exp(0.5 * lv) * eps + mu
    hd = jnp.tanh(z @ p["dw1"] + p["db1"])
    y = jax.nn.sigmoid(hd @ p["dw2"] + p["db2"])
    return mu, lv, z, y


if __name__ == "__main__":
    # Shapes consistent with VAE(enc_sizes, dec_sizes):
    #   enc_sizes = [256, 128, 32], dec_sizes = [32, 128, 256]
    # batch = 256 with batch_tile = 128 -> grid (2,), exercising the parallel
    # grid (both v7x TensorCores) while staying tiny.
    enc_sizes = [256, 128, 32]
    dec_sizes = [32, 128, 256]
    batch = 256

    key = jax.random.PRNGKey(0)
    k_params, k_x, k_eps = jax.random.split(key, 3)

    params = init_params(k_params, enc_sizes, dec_sizes)
    # Bernoulli-style input in [0, 1] (like MNIST pixels fed to a VAE).
    x = jax.random.uniform(k_x, (batch, enc_sizes[0]), jnp.float32)
    # Reparameterization noise (host-drawn, like torch.randn_like).
    eps = jax.random.normal(k_eps, (batch, enc_sizes[2]), jnp.float32)

    mu_r, lv_r, z_r, y_r = vae_forward_ref(x, eps, params)

    # 1) Exact-path correctness check: f32 MXU inputs, tight tolerance.
    mu32, lv32, z32, y32 = jax.block_until_ready(
        vae_forward_pallas(x, eps, params, batch_tile=128,
                           compute_dtype=jnp.float32))
    assert mu32.shape == (batch, enc_sizes[2])
    assert lv32.shape == (batch, enc_sizes[2])
    assert z32.shape == (batch, enc_sizes[2])
    assert y32.shape == (batch, dec_sizes[2])
    assert jnp.allclose(mu32, mu_r, atol=1e-4, rtol=1e-4)
    assert jnp.allclose(lv32, lv_r, atol=1e-4, rtol=1e-4)
    assert jnp.allclose(z32, z_r, atol=1e-4, rtol=1e-4)
    assert jnp.allclose(y32, y_r, atol=1e-4, rtol=1e-4)

    # 2) Fast path (bf16 MXU inputs, default): loose sanity check vs f32 ref.
    mu, logvariance, z, y = jax.block_until_ready(
        vae_forward_pallas(x, eps, params, batch_tile=128))
    assert jnp.allclose(mu, mu_r, atol=1e-1, rtol=1e-1)
    assert jnp.allclose(logvariance, lv_r, atol=1e-1, rtol=1e-1)
    assert jnp.allclose(z, z_r, atol=1e-1, rtol=1e-1)
    assert jnp.allclose(y, y_r, atol=1e-1, rtol=1e-1)

    print("KERNEL_OK")
</pallas_src>

<mosaic_0001>
module attributes {stable_mosaic.version = 11 : i64} {
  func.func @_vae_kernel(%arg0: i32, %arg1: memref<128x256xf32, #tpu.memory_space<vmem>>, %arg2: memref<256x128xf32, #tpu.memory_space<vmem>>, %arg3: memref<1x128xf32, #tpu.memory_space<vmem>>, %arg4: memref<128x64xf32, #tpu.memory_space<vmem>>, %arg5: memref<1x64xf32, #tpu.memory_space<vmem>>, %arg6: memref<128x32xf32, #tpu.memory_space<vmem>>, %arg7: memref<32x128xf32, #tpu.memory_space<vmem>>, %arg8: memref<1x128xf32, #tpu.memory_space<vmem>>, %arg9: memref<128x256xf32, #tpu.memory_space<vmem>>, %arg10: memref<1x256xf32, #tpu.memory_space<vmem>>, %arg11: memref<128x128xf32, #tpu.memory_space<vmem>>, %arg12: memref<128x256xf32, #tpu.memory_space<vmem>>) attributes {dimension_semantics = [#tpu.dimension_semantics<parallel>], iteration_bounds = array<i64: 2>, scalar_prefetch = 0 : i64, scratch_operands = 0 : i64, tpu.core_type = #tpu.core_type<tc>, window_params = [{transform_indices = @transform_0, window_bounds = array<i64: 128, 256>}, {pipeline_mode = #tpu.pipeline_mode<synchronous>, transform_indices = @transform_1, window_bounds = array<i64: 256, 128>}, {pipeline_mode = #tpu.pipeline_mode<synchronous>, transform_indices = @transform_2, window_bounds = array<i64: 1, 128>}, {pipeline_mode = #tpu.pipeline_mode<synchronous>, transform_indices = @transform_3, window_bounds = array<i64: 128, 64>}, {pipeline_mode = #tpu.pipeline_mode<synchronous>, transform_indices = @transform_4, window_bounds = array<i64: 1, 64>}, {transform_indices = @transform_5, window_bounds = array<i64: 128, 32>}, {pipeline_mode = #tpu.pipeline_mode<synchronous>, transform_indices = @transform_6, window_bounds = array<i64: 32, 128>}, {pipeline_mode = #tpu.pipeline_mode<synchronous>, transform_indices = @transform_7, window_bounds = array<i64: 1, 128>}, {pipeline_mode = #tpu.pipeline_mode<synchronous>, transform_indices = @transform_8, window_bounds = array<i64: 128, 256>}, {pipeline_mode = #tpu.pipeline_mode<synchronous>, transform_indices = @transform_9, window_bounds = array<i64: 1, 256>}, {transform_indices = @transform_10, window_bounds = array<i64: 128, 128>}, {transform_indices = @transform_11, window_bounds = array<i64: 128, 256>}]} {
    %c0 = arith.constant 0 : index
    %c0_0 = arith.constant 0 : index
    %0 = vector.load %arg1[%c0, %c0_0] : memref<128x256xf32, #tpu.memory_space<vmem>>, vector<128x256xf32>
    %c0_1 = arith.constant 0 : index
    %c0_2 = arith.constant 0 : index
    %1 = vector.load %arg2[%c0_1, %c0_2] : memref<256x128xf32, #tpu.memory_space<vmem>>, vector<256x128xf32>
    %cst = arith.constant dense<0.000000e+00> : vector<128x128xf32>
    %2 = tpu.matmul %0, %1, %cst {dimension_numbers = #tpu.dot_dimension_numbers<[1], [0], [0], [1], [0, 0, 1, 1], [], []>} : vector<128x256xf32>, vector<256x128xf32>, vector<128x128xf32> -> vector<128x128xf32>
    %c0_3 = arith.constant 0 : index
    %c0_4 = arith.constant 0 : index
    %3 = vector.load %arg3[%c0_3, %c0_4] : memref<1x128xf32, #tpu.memory_space<vmem>>, vector<1x128xf32>
    %4 = vector.broadcast %3 : vector<1x128xf32> to vector<128x128xf32>
    %5 = arith.addf %2, %4 : vector<128x128xf32>
    %6 = math.tanh %5 : vector<128x128xf32>
    %c0_5 = arith.constant 0 : index
    %c0_6 = arith.constant 0 : index
    %7 = vector.load %arg4[%c0_5, %c0_6] : memref<128x64xf32, #tpu.memory_space<vmem>>, vector<128x64xf32>
    %cst_7 = arith.constant dense<0.000000e+00> : vector<128x64xf32>
    %8 = tpu.matmul %6, %7, %cst_7 {dimension_numbers = #tpu.dot_dimension_numbers<[1], [0], [0], [1], [0, 0, 1, 1], [], []>} : vector<128x128xf32>, vector<128x64xf32>, vector<128x64xf32> -> vector<128x64xf32>
    %c0_8 = arith.constant 0 : index
    %c0_9 = arith.constant 0 : index
    %9 = vector.load %arg5[%c0_8, %c0_9] : memref<1x64xf32, #tpu.memory_space<vmem>>, vector<1x64xf32>
    %10 = vector.broadcast %9 : vector<1x64xf32> to vector<128x64xf32>
    %11 = arith.addf %8, %10 : vector<128x64xf32>
    %12 = vector.extract_strided_slice %11 {offsets = [0, 0], sizes = [128, 32], strides = [1, 1]} : vector<128x64xf32> to vector<128x32xf32>
    %13 = vector.extract_strided_slice %11 {offsets = [0, 32], sizes = [128, 32], strides = [1, 1]} : vector<128x64xf32> to vector<128x32xf32>
    %cst_10 = arith.constant 5.000000e-01 : f32
    %14 = vector.broadcast %cst_10 : f32 to vector<128x32xf32>
    %15 = arith.mulf %14, %13 : vector<128x32xf32>
    %16 = math.exp %15 : vector<128x32xf32>
    %c0_11 = arith.constant 0 : index
    %c0_12 = arith.constant 0 : index
    %17 = vector.load %arg6[%c0_11, %c0_12] : memref<128x32xf32, #tpu.memory_space<vmem>>, vector<128x32xf32>
    %18 = arith.mulf %16, %17 : vector<128x32xf32>
    %19 = arith.addf %18, %12 : vector<128x32xf32>
    %c0_13 = arith.constant 0 : index
    %c0_14 = arith.constant 0 : index
    %20 = vector.load %arg7[%c0_13, %c0_14] : memref<32x128xf32, #tpu.memory_space<vmem>>, vector<32x128xf32>
    %cst_15 = arith.constant dense<0.000000e+00> : vector<128x128xf32>
    %21 = tpu.matmul %19, %20, %cst_15 {dimension_numbers = #tpu.dot_dimension_numbers<[1], [0], [0], [1], [0, 0, 1, 1], [], []>} : vector<128x32xf32>, vector<32x128xf32>, vector<128x128xf32> -> vector<128x128xf32>
    %c0_16 = arith.constant 0 : index
    %c0_17 = arith.constant 0 : index
    %22 = vector.load %arg8[%c0_16, %c0_17] : memref<1x128xf32, #tpu.memory_space<vmem>>, vector<1x128xf32>
    %23 = vector.broadcast %22 : vector<1x128xf32> to vector<128x128xf32>
    %24 = arith.addf %21, %23 : vector<128x128xf32>
    %25 = math.tanh %24 : vector<128x128xf32>
    %c0_18 = arith.constant 0 : index
    %c0_19 = arith.constant 0 : index
    %26 = vector.load %arg9[%c0_18, %c0_19] : memref<128x256xf32, #tpu.memory_space<vmem>>, vector<128x256xf32>
    %cst_20 = arith.constant dense<0.000000e+00> : vector<128x256xf32>
    %27 = tpu.matmul %25, %26, %cst_20 {dimension_numbers = #tpu.dot_dimension_numbers<[1], [0], [0], [1], [0, 0, 1, 1], [], []>} : vector<128x128xf32>, vector<128x256xf32>, vector<128x256xf32> -> vector<128x256xf32>
    %c0_21 = arith.constant 0 : index
    %c0_22 = arith.constant 0 : index
    %28 = vector.load %arg10[%c0_21, %c0_22] : memref<1x256xf32, #tpu.memory_space<vmem>>, vector<1x256xf32>
    %29 = vector.broadcast %28 : vector<1x256xf32> to vector<128x256xf32>
    %30 = arith.addf %27, %29 : vector<128x256xf32>
    %31 = arith.negf %30 : vector<128x256xf32>
    %32 = math.exp %31 : vector<128x256xf32>
    %cst_23 = arith.constant 1.000000e+00 : f32
    %33 = vector.broadcast %cst_23 : f32 to vector<128x256xf32>
    %34 = arith.addf %33, %32 : vector<128x256xf32>
    %35 = arith.divf %33, %34 : vector<128x256xf32>
    %c0_24 = arith.constant 0 : index
    %c0_25 = arith.constant 0 : index
    %36 = vector.load %arg12[%c0_24, %c0_25] : memref<128x256xf32, #tpu.memory_space<vmem>>, vector<128x256xf32>
    tpu.vector_store %arg12[%c0_24, %c0_25], %35 {strides = array<i32>} : memref<128x256xf32, #tpu.memory_space<vmem>>, vector<128x256xf32>,
    %37 = tpu.concatenate %12, %13, %19 in 1 : vector<128x32xf32>, vector<128x32xf32>, vector<128x32xf32> -> vector<128x96xf32>
    %cst_26 = arith.constant 0.000000e+00 : f32
    %38 = vector.broadcast %cst_26 : f32 to vector<128x32xf32>
    %39 = tpu.concatenate %37, %38 in 1 : vector<128x96xf32>, vector<128x32xf32> -> vector<128x128xf32>
    %c0_27 = arith.constant 0 : index
    %c0_28 = arith.constant 0 : index
    %40 = vector.load %arg11[%c0_27, %c0_28] : memref<128x128xf32, #tpu.memory_space<vmem>>, vector<128x128xf32>
    tpu.vector_store %arg11[%c0_27, %c0_28], %39 {strides = array<i32>} : memref<128x128xf32, #tpu.memory_space<vmem>>, vector<128x128xf32>,
    return
  }
  func.func @transform_0(%arg0: i32) -> (i32, i32) {
    %c0_i32 = arith.constant 0 : i32
    %c0_i32_0 = arith.constant 0 : i32
    return %arg0, %c0_i32 : i32, i32
  }
  func.func @transform_1(%arg0: i32) -> (i32, i32) {
    %c0_i32 = arith.constant 0 : i32
    %c0_i32_0 = arith.constant 0 : i32
    %c0_i32_1 = arith.constant 0 : i32
    return %c0_i32, %c0_i32_0 : i32, i32
  }
  func.func @transform_2(%arg0: i32) -> (i32, i32) {
    %c0_i32 = arith.constant 0 : i32
    %c0_i32_0 = arith.constant 0 : i32
    %c0_i32_1 = arith.constant 0 : i32
    return %c0_i32, %c0_i32_0 : i32, i32
  }
  func.func @transform_3(%arg0: i32) -> (i32, i32) {
    %c0_i32 = arith.constant 0 : i32
    %c0_i32_0 = arith.constant 0 : i32
    %c0_i32_1 = arith.constant 0 : i32
    return %c0_i32, %c0_i32_0 : i32, i32
  }
  func.func @transform_4(%arg0: i32) -> (i32, i32) {
    %c0_i32 = arith.constant 0 : i32
    %c0_i32_0 = arith.constant 0 : i32
    %c0_i32_1 = arith.constant 0 : i32
    return %c0_i32, %c0_i32_0 : i32, i32
  }
  func.func @transform_5(%arg0: i32) -> (i32, i32) {
    %c0_i32 = arith.constant 0 : i32
    %c0_i32_0 = arith.constant 0 : i32
    return %arg0, %c0_i32 : i32, i32
  }
  func.func @transform_6(%arg0: i32) -> (i32, i32) {
    %c0_i32 = arith.constant 0 : i32
    %c0_i32_0 = arith.constant 0 : i32
    %c0_i32_1 = arith.constant 0 : i32
    return %c0_i32, %c0_i32_0 : i32, i32
  }
  func.func @transform_7(%arg0: i32) -> (i32, i32) {
    %c0_i32 = arith.constant 0 : i32
    %c0_i32_0 = arith.constant 0 : i32
    %c0_i32_1 = arith.constant 0 : i32
    return %c0_i32, %c0_i32_0 : i32, i32
  }
  func.func @transform_8(%arg0: i32) -> (i32, i32) {
    %c0_i32 = arith.constant 0 : i32
    %c0_i32_0 = arith.constant 0 : i32
    %c0_i32_1 = arith.constant 0 : i32
    return %c0_i32, %c0_i32_0 : i32, i32
  }
  func.func @transform_9(%arg0: i32) -> (i32, i32) {
    %c0_i32 = arith.constant 0 : i32
    %c0_i32_0 = arith.constant 0 : i32
    %c0_i32_1 = arith.constant 0 : i32
    return %c0_i32, %c0_i32_0 : i32, i32
  }
  func.func @transform_10(%arg0: i32) -> (i32, i32) {
    %c0_i32 = arith.constant 0 : i32
    %c0_i32_0 = arith.constant 0 : i32
    return %arg0, %c0_i32 : i32, i32
  }
  func.func @transform_11(%arg0: i32) -> (i32, i32) {
    %c0_i32 = arith.constant 0 : i32
    %c0_i32_0 = arith.constant 0 : i32
    return %arg0, %c0_i32 : i32, i32
  }
}

</mosaic_0001>

<llo_original>
// kernel: tpu_custom_call.1
$region0: #{tpu_custom_call.1}
  #allocation0 [shape = 'u32[]', space=smem, size = 0x4, offset = 0x4, fixed_abs, tag = 'smem constant byte address 0x4 - core index']
  #allocation1 [shape = 'u32[144,128]{1,0:T(1,128)}', space=vmem, size = 0x12000, scoped, tag = 'internal scratch']
  %s0 = inlined_call_operand.vmem [shape: f32[256,256], index: 0, kind: input, shape index: {}]
  %s1 = inlined_call_operand.hbm [shape: f32[256,128], index: 1, kind: input, shape index: {}]
  %s2 = inlined_call_operand.vmem [shape: f32[1,128], index: 2, kind: input, shape index: {}]
  %s3 = inlined_call_operand.vmem [shape: f32[128,64], index: 3, kind: input, shape index: {}]
  %s4 = inlined_call_operand.vmem [shape: f32[1,64], index: 4, kind: input, shape index: {}]
  %s5 = inlined_call_operand.vmem [shape: f32[256,32], index: 5, kind: input, shape index: {}]
  %s6 = inlined_call_operand.hbm [shape: f32[32,128], index: 6, kind: input, shape index: {}]
  %s7 = inlined_call_operand.vmem [shape: f32[1,128], index: 7, kind: input, shape index: {}]
  %s8 = inlined_call_operand.hbm [shape: f32[128,256], index: 8, kind: input, shape index: {}]
  %s9 = inlined_call_operand.vmem [shape: f32[1,256], index: 9, kind: input, shape index: {}]
  %s10 = inlined_call_operand.hbm [shape: f32[256,128], index: 10, kind: output, shape index: {0}]
  %s11 = inlined_call_operand.hbm [shape: f32[256,256], index: 11, kind: output, shape index: {1}]
  %12 = xla_tuple %s10, %s11
  %s13 = sld [smem:[#allocation0]]
  $region93: #{tpu_custom_call.1} parent=0
    _
  %s15 = ssub.s32 1, %s13
  %s16 = scalar_select 0, %s15, %s13
  $region1: #{tpu_custom_call.1} parent=0
    #allocation2 [shape = 'u8[131072]{0}', space=vmem, size = 0x20000, scoped, tag = 'input window, operand 1, single buffered']
    #allocation3 [shape = 's32[2]{0}', space=sflag, size = 0x8, scoped, tag = 'scoped memory for tpu_custom_call.1']
    #allocation4 [shape = 's32[2]{0}', space=sflag, size = 0x8, scoped, tag = 'scoped memory for tpu_custom_call.1']
    #allocation5 [shape = 'u8[16384]{0}', space=vmem, size = 0x4000, scoped, tag = 'input window, operand 6, single buffered']
    #allocation6 [shape = 's32[1]{0}', space=sflag, size = 0x4, scoped, tag = 'scoped memory for tpu_custom_call.1']
    #allocation7 [shape = 'u8[131072]{0}', space=vmem, size = 0x20000, scoped, tag = 'input window, operand 8, single buffered']
    #allocation8 [shape = 'u8[131072]{0}', space=vmem, size = 0x20000, scoped, tag = 'output window, operand 0']
    #allocation9 [shape = 'u8[262144]{0}', space=vmem, size = 0x40000, scoped, tag = 'output window, operand 1']
    #allocation10 [shape = 's32[2]{0}', space=sflag, size = 0x8, scoped, tag = 'scoped memory for tpu_custom_call.1']
    %17 = vsyncpa [#allocation3], 0
    %18 = vsyncpa [#allocation6], 0
    %19 = vsyncpa [#allocation4], 0
    %s20 = scalar_lea.sflag [#allocation4], 1
    %21 = vsyncpa %s20, 0
    %22 = vsyncpa [#allocation10], 0
    %s23 = scalar_lea.sflag [#allocation10], 1
    %24 = vsyncpa %s23, 0
    loop: start=0, step=1, limit=4
    $region2: #{tpu_custom_call.1} parent=1 // loop_pre_header
      _
    $region3: #{tpu_custom_call.1} parent=1 // loop_header
      %s26 = sphi 0, %s30
      %p27 = scmp.ge.s32.totalorder %s26, 4
      %s36 = sphi 0, %s38
      %s39 = sphi 0, %s36
      %s40 = sphi 0, %s39
      %s56 = sphi 0, %s40
      %s60 = sphi 0, %s60
      %s62 = sphi 0, %s60
      %s63 = sphi 0, %s62
      %s77 = sphi 0, %s63
      %s81 = sphi 0, %s81
      %s83 = sphi 0, %s81
      %s84 = sphi 0, %s83
      %s98 = sphi 0, %s84
      %s102 = sphi 0, %s102
      %s104 = sphi 0, %s102
      %s105 = sphi 0, %s104
      %s119 = sphi 0, %s105
      %s123 = sphi 0, %s123
      %s125 = sphi 0, %s123
      %s126 = sphi 0, %s125
      %s140 = sphi 0, %s126
      %s146 = sphi 0, %s148
      %s149 = sphi 0, %s146
      %s150 = sphi 0, %s149
      %s166 = sphi 0, %s150
      %s170 = sphi 0, %s170
      %s172 = sphi 0, %s170
      %s173 = sphi 0, %s172
      %s187 = sphi 0, %s173
      %s191 = sphi 0, %s191
      %s193 = sphi 0, %s191
      %s194 = sphi 0, %s193
      %s208 = sphi 0, %s194
      %s212 = sphi 0, %s212
      %s214 = sphi 0, %s212
      %s215 = sphi 0, %s214
      %s229 = sphi 0, %s215
      %s233 = sphi 0, %s233
      %s235 = sphi 0, %s233
      %s236 = sphi 0, %s235
      %s250 = sphi 0, %s236
      %s256 = sphi 0, %s258
      %s259 = sphi 0, %s256
      %s260 = sphi 0, %s259
      %s276 = sphi 0, %s260
      %s282 = sphi 0, %s284
      %s285 = sphi 0, %s282
      %s286 = sphi 0, %s285
      %s302 = sphi 0, %s286
    $region4: #{tpu_custom_call.1} parent=1 // loop_header_branch
      %29 = sbr.rel (%p27) target = $region8
    $region5: #{tpu_custom_call.1} parent=1 // loop_body
      %s31 = ssub.s32 %s26, 1
      %s32 = ssub.s32 %s26, 2
      %s33 = sadd.s32 %s26, 1
      %s34 = ssub.s32 %s26, %s33
      %p35 = scmp.eq.s32.totalorder %s34, 0
      %s37 = sadd.s32 %s36, 1
      %s38 = scalar_select %p35, %s36, %s37
      %p41 = pneg %p35
      %p42 = scmp.eq.s32.totalorder %s26, 1
      %p43 = por %p41, %p42
      %p44 = scmp.ne.s32.totalorder %s36, %s39
      %p45 = scmp.eq.s32.totalorder %s26, 0
      %p46 = por %p44, %p45
      %p47 = scmp.ne.s32.totalorder %s36, %s39
      %p48 = scmp.eq.s32.totalorder %s31, 1
      %p49 = por %p47, %p48
      %p50 = scmp.ne.s32.totalorder %s39, %s40
      %p51 = scmp.eq.s32.totalorder %s31, 0
      %p52 = por %p50, %p51
      %p53 = scmp.ne.s32.totalorder %s39, %s40
      %p54 = scmp.eq.s32.totalorder %s32, 1
      %p55 = por %p53, %p54
      %p57 = scmp.ne.s32.totalorder %s40, %s56
      %p58 = scmp.eq.s32.totalorder %s32, 0
      %p59 = por %p57, %p58
      %s61 = sadd.s32 %s60, 1
      %p64 = scmp.eq.s32.totalorder %s26, 1
      %p65 = scmp.ne.s32.totalorder %s60, %s62
      %p66 = scmp.eq.s32.totalorder %s26, 0
      %p67 = por %p65, %p66
      %p68 = scmp.ne.s32.totalorder %s60, %s62
      %p69 = scmp.eq.s32.totalorder %s31, 1
      %p70 = por %p68, %p69
      %p71 = scmp.ne.s32.totalorder %s62, %s63
      %p72 = scmp.eq.s32.totalorder %s31, 0
      %p73 = por %p71, %p72
      %p74 = scmp.ne.s32.totalorder %s62, %s63
      %p75 = scmp.eq.s32.totalorder %s32, 1
      %p76 = por %p74, %p75
      %p78 = scmp.ne.s32.totalorder %s63, %s77
      %p79 = scmp.eq.s32.totalorder %s32, 0
      %p80 = por %p78, %p79
      %s82 = sadd.s32 %s81, 1
      %p85 = scmp.eq.s32.totalorder %s26, 1
      %p86 = scmp.ne.s32.totalorder %s81, %s83
      %p87 = scmp.eq.s32.totalorder %s26, 0
      %p88 = por %p86, %p87
      %p89 = scmp.ne.s32.totalorder %s81, %s83
      %p90 = scmp.eq.s32.totalorder %s31, 1
      %p91 = por %p89, %p90
      %p92 = scmp.ne.s32.totalorder %s83, %s84
      %p93 = scmp.eq.s32.totalorder %s31, 0
      %p94 = por %p92, %p93
      %p95 = scmp.ne.s32.totalorder %s83, %s84
      %p96 = scmp.eq.s32.totalorder %s32, 1
      %p97 = por %p95, %p96
      %p99 = scmp.ne.s32.totalorder %s84, %s98
      %p100 = scmp.eq.s32.totalorder %s32, 0
      %p101 = por %p99, %p100
      %s103 = sadd.s32 %s102, 1
      %p106 = scmp.eq.s32.totalorder %s26, 1
      %p107 = scmp.ne.s32.totalorder %s102, %s104
      %p108 = scmp.eq.s32.totalorder %s26, 0
      %p109 = por %p107, %p108
      %p110 = scmp.ne.s32.totalorder %s102, %s104
      %p111 = scmp.eq.s32.totalorder %s31, 1
      %p112 = por %p110, %p111
      %p113 = scmp.ne.s32.totalorder %s104, %s105
      %p114 = scmp.eq.s32.totalorder %s31, 0
      %p115 = por %p113, %p114
      %p116 = scmp.ne.s32.totalorder %s104, %s105
      %p117 = scmp.eq.s32.totalorder %s32, 1
      %p118 = por %p116, %p117
      %p120 = scmp.ne.s32.totalorder %s105, %s119
      %p121 = scmp.eq.s32.totalorder %s32, 0
      %p122 = por %p120, %p121
      %s124 = sadd.s32 %s123, 1
      %p127 = scmp.eq.s32.totalorder %s26, 1
      %p128 = scmp.ne.s32.totalorder %s123, %s125
      %p129 = scmp.eq.s32.totalorder %s26, 0
      %p130 = por %p128, %p129
      %p131 = scmp.ne.s32.totalorder %s123, %s125
      %p132 = scmp.eq.s32.totalorder %s31, 1
      %p133 = por %p131, %p132
      %p134 = scmp.ne.s32.totalorder %s125, %s126
      %p135 = scmp.eq.s32.totalorder %s31, 0
      %p136 = por %p134, %p135
      %p137 = scmp.ne.s32.totalorder %s125, %s126
      %p138 = scmp.eq.s32.totalorder %s32, 1
      %p139 = por %p137, %p138
      %p141 = scmp.ne.s32.totalorder %s126, %s140
      %p142 = scmp.eq.s32.totalorder %s32, 0
      %p143 = por %p141, %p142
      %s144 = ssub.s32 %s26, %s33
      %p145 = scmp.eq.s32.totalorder %s144, 0
      %s147 = sadd.s32 %s146, 1
      %s148 = scalar_select %p145, %s146, %s147
      %p151 = pneg %p145
      %p152 = scmp.eq.s32.totalorder %s26, 1
      %p153 = por %p151, %p152
      %p154 = scmp.ne.s32.totalorder %s146, %s149
      %p155 = scmp.eq.s32.totalorder %s26, 0
      %p156 = por %p154, %p155
      %p157 = scmp.ne.s32.totalorder %s146, %s149
      %p158 = scmp.eq.s32.totalorder %s31, 1
      %p159 = por %p157, %p158
      %p160 = scmp.ne.s32.totalorder %s149, %s150
      %p161 = scmp.eq.s32.totalorder %s31, 0
      %p162 = por %p160, %p161
      %p163 = scmp.ne.s32.totalorder %s149, %s150
      %p164 = scmp.eq.s32.totalorder %s32, 1
      %p165 = por %p163, %p164
      %p167 = scmp.ne.s32.totalorder %s150, %s166
      %p168 = scmp.eq.s32.totalorder %s32, 0
      %p169 = por %p167, %p168
      %s171 = sadd.s32 %s170, 1
      %p174 = scmp.eq.s32.totalorder %s26, 1
      %p175 = scmp.ne.s32.totalorder %s170, %s172
      %p176 = scmp.eq.s32.totalorder %s26, 0
      %p177 = por %p175, %p176
      %p178 = scmp.ne.s32.totalorder %s170, %s172
      %p179 = scmp.eq.s32.totalorder %s31, 1
      %p180 = por %p178, %p179
      %p181 = scmp.ne.s32.totalorder %s172, %s173
      %p182 = scmp.eq.s32.totalorder %s31, 0
      %p183 = por %p181, %p182
      %p184 = scmp.ne.s32.totalorder %s172, %s173
      %p185 = scmp.eq.s32.totalorder %s32, 1
      %p186 = por %p184, %p185
      %p188 = scmp.ne.s32.totalorder %s173, %s187
      %p189 = scmp.eq.s32.totalorder %s32, 0
      %p190 = por %p188, %p189
      %s192 = sadd.s32 %s191, 1
      %p195 = scmp.eq.s32.totalorder %s26, 1
      %p196 = scmp.ne.s32.totalorder %s191, %s193
      %p197 = scmp.eq.s32.totalorder %s26, 0
      %p198 = por %p196, %p197
      %p199 = scmp.ne.s32.totalorder %s191, %s193
      %p200 = scmp.eq.s32.totalorder %s31, 1
      %p201 = por %p199, %p200
      %p202 = scmp.ne.s32.totalorder %s193, %s194
      %p203 = scmp.eq.s32.totalorder %s31, 0
      %p204 = por %p202, %p203
      %p205 = scmp.ne.s32.totalorder %s193, %s194
      %p206 = scmp.eq.s32.totalorder %s32, 1
      %p207 = por %p205, %p206
      %p209 = scmp.ne.s32.totalorder %s194, %s208
      %p210 = scmp.eq.s32.totalorder %s32, 0
      %p211 = por %p209, %p210
      %s213 = sadd.s32 %s212, 1
      %p216 = scmp.eq.s32.totalorder %s26, 1
      %p217 = scmp.ne.s32.totalorder %s212, %s214
      %p218 = scmp.eq.s32.totalorder %s26, 0
      %p219 = por %p217, %p218
      %p220 = scmp.ne.s32.totalorder %s212, %s214
      %p221 = scmp.eq.s32.totalorder %s31, 1
      %p222 = por %p220, %p221
      %p223 = scmp.ne.s32.totalorder %s214, %s215
      %p224 = scmp.eq.s32.totalorder %s31, 0
      %p225 = por %p223, %p224
      %p226 = scmp.ne.s32.totalorder %s214, %s215
      %p227 = scmp.eq.s32.totalorder %s32, 1
      %p228 = por %p226, %p227
      %p230 = scmp.ne.s32.totalorder %s215, %s229
      %p231 = scmp.eq.s32.totalorder %s32, 0
      %p232 = por %p230, %p231
      %s234 = sadd.s32 %s233, 1
      %p237 = scmp.eq.s32.totalorder %s26, 1
      %p238 = scmp.ne.s32.totalorder %s233, %s235
      %p239 = scmp.eq.s32.totalorder %s26, 0
      %p240 = por %p238, %p239
      %p241 = scmp.ne.s32.totalorder %s233, %s235
      %p242 = scmp.eq.s32.totalorder %s31, 1
      %p243 = por %p241, %p242
      %p244 = scmp.ne.s32.totalorder %s235, %s236
      %p245 = scmp.eq.s32.totalorder %s31, 0
      %p246 = por %p244, %p245
      %p247 = scmp.ne.s32.totalorder %s235, %s236
      %p248 = scmp.eq.s32.totalorder %s32, 1
      %p249 = por %p247, %p248
      %p251 = scmp.ne.s32.totalorder %s236, %s250
      %p252 = scmp.eq.s32.totalorder %s32, 0
      %p253 = por %p251, %p252
      %s254 = ssub.s32 %s26, %s33
      %p255 = scmp.eq.s32.totalorder %s254, 0
      %s257 = sadd.s32 %s256, 1
      %s258 = scalar_select %p255, %s256, %s257
      %p261 = pneg %p255
      %p262 = scmp.eq.s32.totalorder %s26, 1
      %p263 = por %p261, %p262
      %p264 = scmp.ne.s32.totalorder %s256, %s259
      %p265 = scmp.eq.s32.totalorder %s26, 0
      %p266 = por %p264, %p265
      %p267 = scmp.ne.s32.totalorder %s256, %s259
      %p268 = scmp.eq.s32.totalorder %s31, 1
      %p269 = por %p267, %p268
      %p270 = scmp.ne.s32.totalorder %s259, %s260
      %p271 = scmp.eq.s32.totalorder %s31, 0
      %p272 = por %p270, %p271
      %p273 = scmp.ne.s32.totalorder %s259, %s260
      %p274 = scmp.eq.s32.totalorder %s32, 1
      %p275 = por %p273, %p274
      %p277 = scmp.ne.s32.totalorder %s260, %s276
      %p278 = scmp.eq.s32.totalorder %s32, 0
      %p279 = por %p277, %p278
      %s280 = ssub.s32 %s26, %s33
      %p281 = scmp.eq.s32.totalorder %s280, 0
      %s283 = sadd.s32 %s282, 1
      %s284 = scalar_select %p281, %s282, %s283
      %p287 = pneg %p281
      %p288 = scmp.eq.s32.totalorder %s26, 1
      %p289 = por %p287, %p288
      %p290 = scmp.ne.s32.totalorder %s282, %s285
      %p291 = scmp.eq.s32.totalorder %s26, 0
      %p292 = por %p290, %p291
      %p293 = scmp.ne.s32.totalorder %s282, %s285
      %p294 = scmp.eq.s32.totalorder %s31, 1
      %p295 = por %p293, %p294
      %p296 = scmp.ne.s32.totalorder %s285, %s286
      %p297 = scmp.eq.s32.totalorder %s31, 0
      %p298 = por %p296, %p297
      %p299 = scmp.ne.s32.totalorder %s285, %s286
      %p300 = scmp.eq.s32.totalorder %s32, 1
      %p301 = por %p299, %p300
      %p303 = scmp.ne.s32.totalorder %s286, %s302
      %p304 = scmp.eq.s32.totalorder %s32, 0
      %p305 = por %p303, %p304
      %p306 = scmp.le.s32.totalorder 1, %s26
      %p307 = scmp.lt.s32.totalorder %s26, 3
      %p308 = pnand %p306, %p307
      %p309 = pneg %p308
      // Predicated region
      $region9: #{tpu_custom_call.1} parent=5 // pred_check
        _
      $region10: #{tpu_custom_call.1} parent=5 // pred_check_branch
        %311 = sbr.rel (%p308) target = $region12
      $region11: #{tpu_custom_call.1} parent=5 // pred_region
        %s312 = ssub.s32 %s26, 1
        // Predicated region
        $region13: #{tpu_custom_call.1} parent=11 // pred_check
          %p313 = pneg %p73
        $region14: #{tpu_custom_call.1} parent=11 // pred_check_branch
          %315 = sbr.rel (%p313) target = $region16
        $region15: #{tpu_custom_call.1} parent=11 // pred_region
          %s317 = ssub.s32 4096, 4096
          %318 = vsyncadd [#allocation3], %s317
          %s319 = sshll.u32 [#allocation2], 4
          %s320 = int_to_ptr.vmem [resolvable:$true] %s319
          %325 = dma.hbm_to_vmem [thread:$0]  %s1, 4096, %s320, [#allocation3], 128, 128, 8
        $region16: #{tpu_custom_call.1} parent=11 // pred_fallthru
          _
        // Predicated region
        $region17: #{tpu_custom_call.1} parent=11 // pred_check
          %p326 = pneg %p94
        $region18: #{tpu_custom_call.1} parent=11 // pred_check_branch
          %328 = sbr.rel (%p326) target = $region20
        $region19: #{tpu_custom_call.1} parent=11 // pred_region
          _
        $region20: #{tpu_custom_call.1} parent=11 // pred_fallthru
          _
        // Predicated region
        $region21: #{tpu_custom_call.1} parent=11 // pred_check
          %p329 = pneg %p115
        $region22: #{tpu_custom_call.1} parent=11 // pred_check_branch
          %331 = sbr.rel (%p329) target = $region24
        $region23: #{tpu_custom_call.1} parent=11 // pred_region
          _
        $region24: #{tpu_custom_call.1} parent=11 // pred_fallthru
          _
        // Predicated region
        $region25: #{tpu_custom_call.1} parent=11 // pred_check
          %p332 = pneg %p136
        $region26: #{tpu_custom_call.1} parent=11 // pred_check_branch
          %334 = sbr.rel (%p332) target = $region28
        $region27: #{tpu_custom_call.1} parent=11 // pred_region
          _
        $region28: #{tpu_custom_call.1} parent=11 // pred_fallthru
          _
        // Predicated region
        $region29: #{tpu_custom_call.1} parent=11 // pred_check
          %p335 = pneg %p183
        $region30: #{tpu_custom_call.1} parent=11 // pred_check_branch
          %337 = sbr.rel (%p335) target = $region32
        $region31: #{tpu_custom_call.1} parent=11 // pred_region
          %s339 = ssub.s32 512, 512
          %340 = vsyncadd [#allocation6], %s339
          %s341 = sshll.u32 [#allocation5], 4
          %s342 = int_to_ptr.vmem [resolvable:$true] %s341
          %347 = dma.hbm_to_vmem [thread:$0]  %s6, 512, %s342, [#allocation6], 128, 128, 8
        $region32: #{tpu_custom_call.1} parent=11 // pred_fallthru
          _
        // Predicated region
        $region33: #{tpu_custom_call.1} parent=11 // pred_check
          %p348 = pneg %p204
        $region34: #{tpu_custom_call.1} parent=11 // pred_check_branch
          %350 = sbr.rel (%p348) target = $region36
        $region35: #{tpu_custom_call.1} parent=11 // pred_region
          _
        $region36: #{tpu_custom_call.1} parent=11 // pred_fallthru
          _
        // Predicated region
        $region37: #{tpu_custom_call.1} parent=11 // pred_check
          %p351 = pneg %p225
        $region38: #{tpu_custom_call.1} parent=11 // pred_check_branch
          %353 = sbr.rel (%p351) target = $region40
        $region39: #{tpu_custom_call.1} parent=11 // pred_region
          %s355 = ssub.s32 4096, 4096
          %356 = vsyncadd [#allocation6], %s355
          %s357 = sshll.u32 [#allocation7], 4
          %s358 = int_to_ptr.vmem [resolvable:$true] %s357
          %363 = dma.hbm_to_vmem [thread:$0]  %s8, 4096, %s358, [#allocation6], 256, 256, 16
        $region40: #{tpu_custom_call.1} parent=11 // pred_fallthru
          _
        // Predicated region
        $region41: #{tpu_custom_call.1} parent=11 // pred_check
          %p364 = pneg %p246
        $region42: #{tpu_custom_call.1} parent=11 // pred_check_branch
          %366 = sbr.rel (%p364) target = $region44
        $region43: #{tpu_custom_call.1} parent=11 // pred_region
          _
        $region44: #{tpu_custom_call.1} parent=11 // pred_fallthru
          _
      $region12: #{tpu_custom_call.1} parent=5 // pred_fallthru
        _
      %p367 = scmp.lt.s32.totalorder %s26, 2
      // Predicated region
      $region45: #{tpu_custom_call.1} parent=5 // pred_check
        %p368 = pneg %p367
      $region46: #{tpu_custom_call.1} parent=5 // pred_check_branch
        %370 = sbr.rel (%p368) target = $region48
      $region47: #{tpu_custom_call.1} parent=5 // pred_region
        // Predicated region
        $region49: #{tpu_custom_call.1} parent=47 // pred_check
          %p371 = pneg %p46
        $region50: #{tpu_custom_call.1} parent=47 // pred_check_branch
          %373 = sbr.rel (%p371) target = $region52
        $region51: #{tpu_custom_call.1} parent=47 // pred_region
          %s374 = smul.u32 16, %s26
          %p375 = scmp.lt.s32.totalorder %s374, 31
          %s376 = scalar_select %p375, %s374, 31
          %s377 = smul.addr %s376, 2
          %s378 = smul.addr %s377, 8
          %s379 = scalar_lea.vmem %s0, %s378
          %s380 = smul.u32 16, %s26
        $region52: #{tpu_custom_call.1} parent=47 // pred_fallthru
          _
        // Predicated region
        $region53: #{tpu_custom_call.1} parent=47 // pred_check
          %p381 = pneg %p156
        $region54: #{tpu_custom_call.1} parent=47 // pred_check_branch
          %383 = sbr.rel (%p381) target = $region56
        $region55: #{tpu_custom_call.1} parent=47 // pred_region
          %s384 = smul.u32 16, %s26
          %p385 = scmp.lt.s32.totalorder %s384, 31
          %s386 = scalar_select %p385, %s384, 31
          %s387 = smul.addr %s386, 8
          %s388 = scalar_lea.vmem %s5, %s387
          %s389 = smul.u32 16, %s26
        $region56: #{tpu_custom_call.1} parent=47 // pred_fallthru
          _
      $region48: #{tpu_custom_call.1} parent=5 // pred_fallthru
        _
      %p390 = scmp.le.s32.totalorder 1, %s26
      %p391 = scmp.lt.s32.totalorder %s26, 3
      %p392 = pnand %p390, %p391
      %p393 = pneg %p392
      // Predicated region
      $region57: #{tpu_custom_call.1} parent=5 // pred_check
        _
      $region58: #{tpu_custom_call.1} parent=5 // pred_check_branch
        %395 = sbr.rel (%p392) target = $region60
      $region59: #{tpu_custom_call.1} parent=5 // pred_region
        %s396 = ssub.s32 %s26, 1
        // Predicated region
        $region61: #{tpu_custom_call.1} parent=59 // pred_check
          %p397 = pneg %p73
        $region62: #{tpu_custom_call.1} parent=59 // pred_check_branch
          %399 = sbr.rel (%p397) target = $region64
        $region63: #{tpu_custom_call.1} parent=59 // pred_region
          %400 = dma.done [#allocation3], 4096
        $region64: #{tpu_custom_call.1} parent=59 // pred_fallthru
          _
        // Predicated region
        $region65: #{tpu_custom_call.1} parent=59 // pred_check
          %p401 = pneg %p183
        $region66: #{tpu_custom_call.1} parent=59 // pred_check_branch
          %403 = sbr.rel (%p401) target = $region68
        $region67: #{tpu_custom_call.1} parent=59 // pred_region
          %404 = dma.done [#allocation6], 512
        $region68: #{tpu_custom_call.1} parent=59 // pred_fallthru
          _
        // Predicated region
        $region69: #{tpu_custom_call.1} parent=59 // pred_check
          %p405 = pneg %p225
        $region70: #{tpu_custom_call.1} parent=59 // pred_check_branch
          %407 = sbr.rel (%p405) target = $region72
        $region71: #{tpu_custom_call.1} parent=59 // pred_region
          %408 = dma.done [#allocation6], 4096
        $region72: #{tpu_custom_call.1} parent=59 // pred_fallthru
          _
        %s409 = smul.u32 16, %s31
        %p410 = scmp.lt.s32.totalorder %s409, 31
        %s411 = scalar_select %p410, %s409, 31
        %s412 = smul.addr %s411, 2
        %s413 = smul.addr %s412, 8
        %s414 = scalar_lea.vmem %s0, %s413
        %p415 = pneg %p52
        %p416 = pneg %p49
        %p417 = pneg %p73
        %p418 = pneg %p70
        %p419 = pneg %p94
        %p420 = pneg %p91
        %p421 = pneg %p115
        %p422 = pneg %p112
        %p423 = pneg %p136
        %p424 = pneg %p133
        %s425 = smul.u32 16, %s31
        %p426 = scmp.lt.s32.totalorder %s425, 31
        %s427 = scalar_select %p426, %s425, 31
        %s428 = smul.addr %s427, 8
        %s429 = scalar_lea.vmem %s5, %s428
        %p430 = pneg %p162
        %p431 = pneg %p159
        %p432 = pneg %p183
        %p433 = pneg %p180
        %p434 = pneg %p204
        %p435 = pneg %p201
        %p436 = pneg %p225
        %p437 = pneg %p222
        %p438 = pneg %p246
        %p439 = pneg %p243
        %p440 = pneg %p272
        %p441 = pneg %p269
        %s442 = sand.u32 %s259, 1
        %s443 = scalar_lea.sflag [#allocation4], %s442
        %s444 = sand.u32 %s259, 1
        %s445 = smul.addr %s444, 128
        %s446 = scalar_lea.vmem [#allocation8], %s445
        %p447 = pneg %p298
        %p448 = pneg %p295
        %s449 = sand.u32 %s285, 1
        %s450 = scalar_lea.sflag [#allocation10], %s449
        %s451 = sand.u32 %s285, 1
        %s452 = smul.addr %s451, 256
        %s453 = scalar_lea.vmem [#allocation9], %s452
        %s454 = smul.u32 16, %s31
        %p455 = scmp.lt.s32.totalorder %s454, 31
        %s456 = scalar_select %p455, %s454, 31
        %s457 = smul.addr %s456, 2
        %s458 = smul.addr %s457, 8
        %s459 = scalar_lea.vmem %s0, %s458
        %s460 = smul.u32 16, %s31
        %s461 = smul.u32 16, %s31
        %p462 = scmp.lt.s32.totalorder %s461, 31
        %s463 = scalar_select %p462, %s461, 31
        %s464 = smul.addr %s463, 8
        %s465 = scalar_lea.vmem %s5, %s464
        %s466 = smul.u32 16, %s31
        %s467 = smul.u32 16, %s31
        %s468 = smul.u32 16, %s31
        %v469 = vld [vmem:[%s459] sm:$0xff]
        %v470 = vld [vmem:[%s459 + $0x8] sm:$0xff]
        %v471 = vld [vmem:[%s459 + $0x10] sm:$0xff]
        %v472 = vld [vmem:[%s459 + $0x18] sm:$0xff]
        %v473 = vld [vmem:[%s459 + $0x20] sm:$0xff]
        %v474 = vld [vmem:[%s459 + $0x28] sm:$0xff]
        %v475 = vld [vmem:[%s459 + $0x30] sm:$0xff]
        %v476 = vld [vmem:[%s459 + $0x38] sm:$0xff]
        %v477 = vld [vmem:[%s459 + $0x40] sm:$0xff]
        %v478 = vld [vmem:[%s459 + $0x48] sm:$0xff]
        %v479 = vld [vmem:[%s459 + $0x50] sm:$0xff]
        %v480 = vld [vmem:[%s459 + $0x58] sm:$0xff]
        %v481 = vld [vmem:[%s459 + $0x60] sm:$0xff]
        %v482 = vld [vmem:[%s459 + $0x68] sm:$0xff]
        %v483 = vld [vmem:[%s459 + $0x70] sm:$0xff]
        %v484 = vld [vmem:[%s459 + $0x78] sm:$0xff]
        %v485 = vld [vmem:[%s459 + $0x80] sm:$0xff]
        %v486 = vld [vmem:[%s459 + $0x88] sm:$0xff]
        %v487 = vld [vmem:[%s459 + $0x90] sm:$0xff]
        %v488 = vld [vmem:[%s459 + $0x98] sm:$0xff]
        %v489 = vld [vmem:[%s459 + $0xa0] sm:$0xff]
        %v490 = vld [vmem:[%s459 + $0xa8] sm:$0xff]
        %v491 = vld [vmem:[%s459 + $0xb0] sm:$0xff]
        %v492 = vld [vmem:[%s459 + $0xb8] sm:$0xff]
        %v493 = vld [vmem:[%s459 + $0xc0] sm:$0xff]
        %v494 = vld [vmem:[%s459 + $0xc8] sm:$0xff]
        %v495 = vld [vmem:[%s459 + $0xd0] sm:$0xff]
        %v496 = vld [vmem:[%s459 + $0xd8] sm:$0xff]
        %v497 = vld [vmem:[%s459 + $0xe0] sm:$0xff]
        %v498 = vld [vmem:[%s459 + $0xe8] sm:$0xff]
        %v499 = vld [vmem:[%s459 + $0xf0] sm:$0xff]
        %v500 = vld [vmem:[%s459 + $0xf8] sm:$0xff]
        %v501 = vld [vmem:[#allocation2] sm:$0xff]
        %v502 = vld [vmem:[#allocation2 + $0x8] sm:$0xff]
        %v503 = vld [vmem:[#allocation2 + $0x10] sm:$0xff]
        %v504 = vld [vmem:[#allocation2 + $0x18] sm:$0xff]
        %v505 = vld [vmem:[#allocation2 + $0x20] sm:$0xff]
        %v506 = vld [vmem:[#allocation2 + $0x28] sm:$0xff]
        %v507 = vld [vmem:[#allocation2 + $0x30] sm:$0xff]
        %v508 = vld [vmem:[#allocation2 + $0x38] sm:$0xff]
        %v509 = vld [vmem:[#allocation2 + $0x40] sm:$0xff]
        %v510 = vld [vmem:[#allocation2 + $0x48] sm:$0xff]
        %v511 = vld [vmem:[#allocation2 + $0x50] sm:$0xff]
        %v512 = vld [vmem:[#allocation2 + $0x58] sm:$0xff]
        %v513 = vld [vmem:[#allocation2 + $0x60] sm:$0xff]
        %v514 = vld [vmem:[#allocation2 + $0x68] sm:$0xff]
        %v515 = vld [vmem:[#allocation2 + $0x70] sm:$0xff]
        %v516 = vld [vmem:[#allocation2 + $0x78] sm:$0xff]
        %v517 = vld [vmem:[#allocation2 + $0x80] sm:$0xff]
        %v518 = vld [vmem:[#allocation2 + $0x88] sm:$0xff]
        %v519 = vld [vmem:[#allocation2 + $0x90] sm:$0xff]
        %v520 = vld [vmem:[#allocation2 + $0x98] sm:$0xff]
        %v521 = vld [vmem:[#allocation2 + $0xa0] sm:$0xff]
        %v522 = vld [vmem:[#allocation2 + $0xa8] sm:$0xff]
        %v523 = vld [vmem:[#allocation2 + $0xb0] sm:$0xff]
        %v524 = vld [vmem:[#allocation2 + $0xb8] sm:$0xff]
        %v525 = vld [vmem:[#allocation2 + $0xc0] sm:$0xff]
        %v526 = vld [vmem:[#allocation2 + $0xc8] sm:$0xff]
        %v527 = vld [vmem:[#allocation2 + $0xd0] sm:$0xff]
        %v528 = vld [vmem:[#allocation2 + $0xd8] sm:$0xff]
        %v529 = vld [vmem:[#allocation2 + $0xe0] sm:$0xff]
        %v530 = vld [vmem:[#allocation2 + $0xe8] sm:$0xff]
        %v531 = vld [vmem:[#allocation2 + $0xf0] sm:$0xff]
        %v532 = vld [vmem:[#allocation2 + $0xf8] sm:$0xff]
        %v533 = vld [vmem:[%s2] sm:$0x1]
        %v535 = vlaneseq
        %v536 = vshrl.u32 %v535, 7
        %v537 = vsub.s32 0, %v536
        %v538 = vrot.slane %v533, %v537
        %540 = vmatprep.subr.mxu0 0.0
        %541 = vmatpush1.msra.mxu0 %v501
        %542 = vmatprep.subr.mxu0 0.0
        %543 = vmatpush1.msra.mxu0 %v502
        %544 = vmatprep.subr.mxu0 0.0
        %545 = vmatpush1.msra.mxu0 %v503
        %546 = vmatprep.subr.mxu0 0.0
        %547 = vmatpush1.msra.mxu0 %v504
        %548 = vmatprep.subr.mxu0 0.0
        %549 = vmatpush1.msra.mxu0 %v505
        %550 = vmatprep.subr.mxu0 0.0
        %551 = vmatpush1.msra.mxu0 %v506
        %552 = vmatprep.subr.mxu0 0.0
        %553 = vmatpush1.msra.mxu0 %v507
        %554 = vmatprep.subr.mxu0 0.0
        %555 = vmatpush1.msra.mxu0 %v508
        %556 = vmatprep.subr.mxu0 0.0
        %557 = vmatpush1.msra.mxu0 %v509
        %558 = vmatprep.subr.mxu0 0.0
        %559 = vmatpush1.msra.mxu0 %v510
        %560 = vmatprep.subr.mxu0 0.0
        %561 = vmatpush1.msra.mxu0 %v511
        %562 = vmatprep.subr.mxu0 0.0
        %563 = vmatpush1.msra.mxu0 %v512
        %564 = vmatprep.subr.mxu0 0.0
        %565 = vmatpush1.msra.mxu0 %v513
        %566 = vmatprep.subr.mxu0 0.0
        %567 = vmatpush1.msra.mxu0 %v514
        %568 = vmatprep.subr.mxu0 0.0
        %569 = vmatpush1.msra.mxu0 %v515
        %570 = vmatprep.subr.mxu0 0.0
        %571 = vmatpush1.msra.mxu0 %v516
        %572 = vmatprep.subr.mxu0 0.0
        %573 = vmatpush1.msra.mxu0 %v517
        %574 = vmatprep.subr.mxu0 0.0
        %575 = vmatpush1.msra.mxu0 %v518
        %576 = vmatprep.subr.mxu0 0.0
        %577 = vmatpush1.msra.mxu0 %v519
        %578 = vmatprep.subr.mxu0 0.0
        %579 = vmatpush1.msra.mxu0 %v520
        %580 = vmatprep.subr.mxu0 0.0
        %581 = vmatpush1.msra.mxu0 %v521
        %582 = vmatprep.subr.mxu0 0.0
        %583 = vmatpush1.msra.mxu0 %v522
        %584 = vmatprep.subr.mxu0 0.0
        %585 = vmatpush1.msra.mxu0 %v523
        %586 = vmatprep.subr.mxu0 0.0
        %587 = vmatpush1.msra.mxu0 %v524
        %588 = vmatprep.subr.mxu0 0.0
        %589 = vmatpush1.msra.mxu0 %v525
        %590 = vmatprep.subr.mxu0 0.0
        %591 = vmatpush1.msra.mxu0 %v526
        %592 = vmatprep.subr.mxu0 0.0
        %593 = vmatpush1.msra.mxu0 %v527
        %594 = vmatprep.subr.mxu0 0.0
        %595 = vmatpush1.msra.mxu0 %v528
        %596 = vmatprep.subr.mxu0 0.0
        %597 = vmatpush1.msra.mxu0 %v529
        %598 = vmatprep.subr.mxu0 0.0
        %599 = vmatpush1.msra.mxu0 %v530
        %600 = vmatprep.subr.mxu0 0.0
        %601 = vmatpush1.msra.mxu0 %v531
        %602 = vmatprep.subr.mxu0 0.0
        %603 = vmatpush1.msra.mxu0 %v532
        %604 = vmatprep.mubr.f32.mxu0 %v470
        %605 = vmatmul.mubr.f32.gmra.mrb[0].mxu0 %v469
        %v606 = vpop.f32.mrb[0].mxu0
        %v607 = vadd.f32 %v538, %v606
        %v608 = vpop.f32.mrb[0].mxu0
        %609 = vmatprep.mubr.f32.mxu0 %v472
        %610 = vmatmul.mubr.f32.gmra.mrb[0].mxu0 %v471
        %v611 = vpop.f32.mrb[0].mxu0
        %v612 = vadd.f32 %v538, %v611
        %v613 = vpop.f32.mrb[0].mxu0
        %614 = vmatprep.mubr.f32.mxu0 %v474
        %615 = vmatmul.mubr.f32.gmra.mrb[0].mxu0 %v473
        %v616 = vpop.f32.mrb[0].mxu0
        %v617 = vadd.f32 %v538, %v616
        %v618 = vpop.f32.mrb[0].mxu0
        %619 = vmatprep.mubr.f32.mxu0 %v476
        %620 = vmatmul.mubr.f32.gmra.mrb[0].mxu0 %v475
        %v621 = vpop.f32.mrb[0].mxu0
        %v622 = vadd.f32 %v538, %v621
        %v623 = vpop.f32.mrb[0].mxu0
        %624 = vmatprep.mubr.f32.mxu0 %v478
        %625 = vmatmul.mubr.f32.gmra.mrb[0].mxu0 %v477
        %v626 = vpop.f32.mrb[0].mxu0
        %v627 = vadd.f32 %v538, %v626
        %v628 = vpop.f32.mrb[0].mxu0
        %629 = vmatprep.mubr.f32.mxu0 %v480
        %630 = vmatmul.mubr.f32.gmra.mrb[0].mxu0 %v479
        %v631 = vpop.f32.mrb[0].mxu0
        %v632 = vadd.f32 %v538, %v631
        %v633 = vpop.f32.mrb[0].mxu0
        %634 = vmatprep.mubr.f32.mxu0 %v482
        %635 = vmatmul.mubr.f32.gmra.mrb[0].mxu0 %v481
        %v636 = vpop.f32.mrb[0].mxu0
        %v637 = vadd.f32 %v538, %v636
        %v638 = vpop.f32.mrb[0].mxu0
        %639 = vmatprep.mubr.f32.mxu0 %v484
        %640 = vmatmul.mubr.f32.gmra.mrb[0].mxu0 %v483
        %v641 = vpop.f32.mrb[0].mxu0
        %v642 = vadd.f32 %v538, %v641
        %v643 = vpop.f32.mrb[0].mxu0
        %644 = vmatprep.mubr.f32.mxu0 %v486
        %645 = vmatmul.mubr.f32.gmra.mrb[0].mxu0 %v485
        %v646 = vpop.f32.mrb[0].mxu0
        %v647 = vadd.f32 %v538, %v646
        %v648 = vpop.f32.mrb[0].mxu0
        %649 = vmatprep.mubr.f32.mxu0 %v488
        %650 = vmatmul.mubr.f32.gmra.mrb[0].mxu0 %v487
        %v651 = vpop.f32.mrb[0].mxu0
        %v652 = vadd.f32 %v538, %v651
        %v653 = vpop.f32.mrb[0].mxu0
        %654 = vmatprep.mubr.f32.mxu0 %v490
        %655 = vmatmul.mubr.f32.gmra.mrb[0].mxu0 %v489
        %v656 = vpop.f32.mrb[0].mxu0
        %v657 = vadd.f32 %v538, %v656
        %v658 = vpop.f32.mrb[0].mxu0
        %659 = vmatprep.mubr.f32.mxu0 %v492
        %660 = vmatmul.mubr.f32.gmra.mrb[0].mxu0 %v491
        %v661 = vpop.f32.mrb[0].mxu0
        %v662 = vadd.f32 %v538, %v661
        %v663 = vpop.f32.mrb[0].mxu0
        %664 = vmatprep.mubr.f32.mxu0 %v494
        %665 = vmatmul.mubr.f32.gmra.mrb[0].mxu0 %v493
        %v666 = vpop.f32.mrb[0].mxu0
        %v667 = vadd.f32 %v538, %v666
        %v668 = vpop.f32.mrb[0].mxu0
        %669 = vmatprep.mubr.f32.mxu0 %v496
        %670 = vmatmul.mubr.f32.gmra.mrb[0].mxu0 %v495
        %v671 = vpop.f32.mrb[0].mxu0
        %v672 = vadd.f32 %v538, %v671
        %v673 = vpop.f32.mrb[0].mxu0
        %674 = vmatprep.mubr.f32.mxu0 %v498
        %675 = vmatmul.mubr.f32.gmra.mrb[0].mxu0 %v497
        %v676 = vpop.f32.mrb[0].mxu0
        %v677 = vadd.f32 %v538, %v676
        %v678 = vpop.f32.mrb[0].mxu0
        %679 = vmatprep.mubr.f32.mxu0 %v500
        %680 = vmatmul.mubr.f32.gmra.mrb[0].mxu0 %v499
        %v681 = vpop.f32.mrb[0].mxu0
        %v682 = vadd.f32 %v538, %v681
        %v683 = vpop.f32.mrb[0].mxu0
        %684 = vdwg.mxu0
        %v685 = vtanh.pop %v607
        %v686 = vtanh.pop %v612
        %v687 = vtanh.pop %v617
        %v688 = vtanh.pop %v622
        %v689 = vtanh.pop %v627
        %v690 = vtanh.pop %v632
        %v691 = vtanh.pop %v637
        %v692 = vtanh.pop %v642
        %v693 = vtanh.pop %v647
        %v694 = vtanh.pop %v652
        %v695 = vtanh.pop %v657
        %v696 = vtanh.pop %v662
        %v697 = vtanh.pop %v667
        %v698 = vtanh.pop %v672
        %v699 = vtanh.pop %v677
        %v700 = vtanh.pop %v682
        %v701 = vld [vmem:[%s3] sm:$0xff]
        %v702 = vld [vmem:[%s3 + $0x8] sm:$0xff]
        %v703 = vld [vmem:[%s3 + $0x10] sm:$0xff]
        %v704 = vld [vmem:[%s3 + $0x18] sm:$0xff]
        %v705 = vld [vmem:[%s3 + $0x20] sm:$0xff]
        %v706 = vld [vmem:[%s3 + $0x28] sm:$0xff]
        %v707 = vld [vmem:[%s3 + $0x30] sm:$0xff]
        %v708 = vld [vmem:[%s3 + $0x38] sm:$0xff]
        %v709 = vld [vmem:[%s3 + $0x40] sm:$0xff]
        %v710 = vld [vmem:[%s3 + $0x48] sm:$0xff]
        %v711 = vld [vmem:[%s3 + $0x50] sm:$0xff]
        %v712 = vld [vmem:[%s3 + $0x58] sm:$0xff]
        %v713 = vld [vmem:[%s3 + $0x60] sm:$0xff]
        %v714 = vld [vmem:[%s3 + $0x68] sm:$0xff]
        %v715 = vld [vmem:[%s3 + $0x70] sm:$0xff]
        %v716 = vld [vmem:[%s3 + $0x78] sm:$0xff]
        %v717 = vld [vmem:[%s4] sm:$0x1]
        %v719 = vlaneseq
        %v720 = vshrl.u32 %v719, 7
        %v721 = vsub.s32 0, %v720
        %v722 = vrot.slane %v717, %v721
        %724 = vmatprep.subr.mxu0 0.0
        %725 = vmatpush1.msra.mxu0 %v701
        %726 = vmatprep.subr.mxu0 0.0
        %727 = vmatpush1.msra.mxu0 %v702
        %728 = vmatprep.subr.mxu0 0.0
        %729 = vmatpush1.msra.mxu0 %v703
        %730 = vmatprep.subr.mxu0 0.0
        %731 = vmatpush1.msra.mxu0 %v704
        %732 = vmatprep.subr.mxu0 0.0
        %733 = vmatpush1.msra.mxu0 %v705
        %734 = vmatprep.subr.mxu0 0.0
        %735 = vmatpush1.msra.mxu0 %v706
        %736 = vmatprep.subr.mxu0 0.0
        %737 = vmatpush1.msra.mxu0 %v707
        %738 = vmatprep.subr.mxu0 0.0
        %739 = vmatpush1.msra.mxu0 %v708
        %740 = vmatprep.subr.mxu0 0.0
        %741 = vmatpush1.msra.mxu0 %v709
        %742 = vmatprep.subr.mxu0 0.0
        %743 = vmatpush1.msra.mxu0 %v710
        %744 = vmatprep.subr.mxu0 0.0
        %745 = vmatpush1.msra.mxu0 %v711
        %746 = vmatprep.subr.mxu0 0.0
        %747 = vmatpush1.msra.mxu0 %v712
        %748 = vmatprep.subr.mxu0 0.0
        %749 = vmatpush1.msra.mxu0 %v713
        %750 = vmatprep.subr.mxu0 0.0
        %751 = vmatpush1.msra.mxu0 %v714
        %752 = vmatprep.subr.mxu0 0.0
        %753 = vmatpush1.msra.mxu0 %v715
        %754 = vmatprep.subr.mxu0 0.0
        %755 = vmatpush1.msra.mxu0 %v716
        %756 = vmatprep.subr.mxu0 0.0
        %757 = vmatpush1.msra.mxu0 0.0
        %758 = vmatprep.subr.mxu0 0.0
        %759 = vmatpush1.msra.mxu0 0.0
        %760 = vmatprep.subr.mxu0 0.0
        %761 = vmatpush1.msra.mxu0 0.0
        %762 = vmatprep.subr.mxu0 0.0
        %763 = vmatpush1.msra.mxu0 0.0
        %764 = vmatprep.subr.mxu0 0.0
        %765 = vmatpush1.msra.mxu0 0.0
        %766 = vmatprep.subr.mxu0 0.0
        %767 = vmatpush1.msra.mxu0 0.0
        %768 = vmatprep.subr.mxu0 0.0
        %769 = vmatpush1.msra.mxu0 0.0
        %770 = vmatprep.subr.mxu0 0.0
        %771 = vmatpush1.msra.mxu0 0.0
        %772 = vmatprep.subr.mxu0 0.0
        %773 = vmatpush1.msra.mxu0 0.0
        %774 = vmatprep.subr.mxu0 0.0
        %775 = vmatpush1.msra.mxu0 0.0
        %776 = vmatprep.subr.mxu0 0.0
        %777 = vmatpush1.msra.mxu0 0.0
        %778 = vmatprep.subr.mxu0 0.0
        %779 = vmatpush1.msra.mxu0 0.0
        %780 = vmatprep.subr.mxu0 0.0
        %781 = vmatpush1.msra.mxu0 0.0
        %782 = vmatprep.subr.mxu0 0.0
        %783 = vmatpush1.msra.mxu0 0.0
        %784 = vmatprep.subr.mxu0 0.0
        %785 = vmatpush1.msra.mxu0 0.0
        %786 = vmatprep.subr.mxu0 0.0
        %787 = vmatpush1.msra.mxu0 0.0
        %788 = vmatprep.mubr.f32.mxu0 0.0
        %789 = vmatmul.mubr.f32.gmra.mrb[0].mxu0 %v685
        %v790 = vpop.f32.mrb[0].mxu0
        %v791 = vadd.f32 %v722, %v790
        %v792 = vpop.f32.mrb[0].mxu0
        %793 = vmatprep.mubr.f32.mxu0 0.0
        %794 = vmatmul.mubr.f32.gmra.mrb[0].mxu0 %v686
        %v795 = vpop.f32.mrb[0].mxu0
        %v796 = vadd.f32 %v722, %v795
        %v797 = vpop.f32.mrb[0].mxu0
        %798 = vmatprep.mubr.f32.mxu0 0.0
        %799 = vmatmul.mubr.f32.gmra.mrb[0].mxu0 %v687
        %v800 = vpop.f32.mrb[0].mxu0
        %v801 = vadd.f32 %v722, %v800
        %v802 = vpop.f32.mrb[0].mxu0
        %803 = vmatprep.mubr.f32.mxu0 0.0
        %804 = vmatmul.mubr.f32.gmra.mrb[0].mxu0 %v688
        %v805 = vpop.f32.mrb[0].mxu0
        %v806 = vadd.f32 %v722, %v805
        %v807 = vpop.f32.mrb[0].mxu0
        %808 = vmatprep.mubr.f32.mxu0 0.0
        %809 = vmatmul.mubr.f32.gmra.mrb[0].mxu0 %v689
        %v810 = vpop.f32.mrb[0].mxu0
        %v811 = vadd.f32 %v722, %v810
        %v812 = vpop.f32.mrb[0].mxu0
        %813 = vmatprep.mubr.f32.mxu0 0.0
        %814 = vmatmul.mubr.f32.gmra.mrb[0].mxu0 %v690
        %v815 = vpop.f32.mrb[0].mxu0
        %v816 = vadd.f32 %v722, %v815
        %v817 = vpop.f32.mrb[0].mxu0
        %818 = vmatprep.mubr.f32.mxu0 0.0
        %819 = vmatmul.mubr.f32.gmra.mrb[0].mxu0 %v691
        %v820 = vpop.f32.mrb[0].mxu0
        %v821 = vadd.f32 %v722, %v820
        %v822 = vpop.f32.mrb[0].mxu0
        %823 = vmatprep.mubr.f32.mxu0 0.0
        %824 = vmatmul.mubr.f32.gmra.mrb[0].mxu0 %v692
        %v825 = vpop.f32.mrb[0].mxu0
        %v826 = vadd.f32 %v722, %v825
        %v827 = vpop.f32.mrb[0].mxu0
        %828 = vmatprep.mubr.f32.mxu0 0.0
        %829 = vmatmul.mubr.f32.gmra.mrb[0].mxu0 %v693
        %v830 = vpop.f32.mrb[0].mxu0
        %v831 = vadd.f32 %v722, %v830
        %v832 = vpop.f32.mrb[0].mxu0
        %833 = vmatprep.mubr.f32.mxu0 0.0
        %834 = vmatmul.mubr.f32.gmra.mrb[0].mxu0 %v694
        %v835 = vpop.f32.mrb[0].mxu0
        %v836 = vadd.f32 %v722, %v835
        %v837 = vpop.f32.mrb[0].mxu0
        %838 = vmatprep.mubr.f32.mxu0 0.0
        %839 = vmatmul.mubr.f32.gmra.mrb[0].mxu0 %v695
        %v840 = vpop.f32.mrb[0].mxu0
        %v841 = vadd.f32 %v722, %v840
        %v842 = vpop.f32.mrb[0].mxu0
        %843 = vmatprep.mubr.f32.mxu0 0.0
        %844 = vmatmul.mubr.f32.gmra.mrb[0].mxu0 %v696
        %v845 = vpop.f32.mrb[0].mxu0
        %v846 = vadd.f32 %v722, %v845
        %v847 = vpop.f32.mrb[0].mxu0
        %848 = vmatprep.mubr.f32.mxu0 0.0
        %849 = vmatmul.mubr.f32.gmra.mrb[0].mxu0 %v697
        %v850 = vpop.f32.mrb[0].mxu0
        %v851 = vadd.f32 %v722, %v850
        %v852 = vpop.f32.mrb[0].mxu0
        %853 = vmatprep.mubr.f32.mxu0 0.0
        %854 = vmatmul.mubr.f32.gmra.mrb[0].mxu0 %v698
        %v855 = vpop.f32.mrb[0].mxu0
        %v856 = vadd.f32 %v722, %v855
        %v857 = vpop.f32.mrb[0].mxu0
        %858 = vmatprep.mubr.f32.mxu0 0.0
        %859 = vmatmul.mubr.f32.gmra.mrb[0].mxu0 %v699
        %v860 = vpop.f32.mrb[0].mxu0
        %v861 = vadd.f32 %v722, %v860
        %v862 = vpop.f32.mrb[0].mxu0
        %863 = vmatprep.mubr.f32.mxu0 0.0
        %864 = vmatmul.mubr.f32.gmra.mrb[0].mxu0 %v700
        %v865 = vpop.f32.mrb[0].mxu0
        %v866 = vadd.f32 %v722, %v865
        %v867 = vpop.f32.mrb[0].mxu0
        %868 = vdwg.mxu0
        %v869 = vmul.f32 %v791, 0.5
        %v870 = vmul.f32 %v796, 0.5
        %v871 = vmul.f32 %v801, 0.5
        %v872 = vmul.f32 %v806, 0.5
        %v873 = vmul.f32 %v811, 0.5
        %v874 = vmul.f32 %v816, 0.5
        %v875 = vmul.f32 %v821, 0.5
        %v876 = vmul.f32 %v826, 0.5
        %v877 = vmul.f32 %v831, 0.5
        %v878 = vmul.f32 %v836, 0.5
        %v879 = vmul.f32 %v841, 0.5
        %v880 = vmul.f32 %v846, 0.5
        %v881 = vmul.f32 %v851, 0.5
        %v882 = vmul.f32 %v856, 0.5
        %v883 = vmul.f32 %v861, 0.5
        %v884 = vmul.f32 %v866, 0.5
        %v885 = vmul.f32 %v869, 1.442695
        %v886 = vpow.pop %v885
        %v887 = vmul.f32 %v870, 1.442695
        %v888 = vpow.pop %v887
        %v889 = vmul.f32 %v871, 1.442695
        %v890 = vpow.pop %v889
        %v891 = vmul.f32 %v872, 1.442695
        %v892 = vpow.pop %v891
        %v893 = vmul.f32 %v873, 1.442695
        %v894 = vpow.pop %v893
        %v895 = vmul.f32 %v874, 1.442695
        %v896 = vpow.pop %v895
        %v897 = vmul.f32 %v875, 1.442695
        %v898 = vpow.pop %v897
        %v899 = vmul.f32 %v876, 1.442695
        %v900 = vpow.pop %v899
        %v901 = vmul.f32 %v877, 1.442695
        %v902 = vpow.pop %v901
        %v903 = vmul.f32 %v878, 1.442695
        %v904 = vpow.pop %v903
        %v905 = vmul.f32 %v879, 1.442695
        %v906 = vpow.pop %v905
        %v907 = vmul.f32 %v880, 1.442695
        %v908 = vpow.pop %v907
        %v909 = vmul.f32 %v881, 1.442695
        %v910 = vpow.pop %v909
        %v911 = vmul.f32 %v882, 1.442695
        %v912 = vpow.pop %v911
        %v913 = vmul.f32 %v883, 1.442695
        %v914 = vpow.pop %v913
        %v915 = vmul.f32 %v884, 1.442695
        %v916 = vpow.pop %v915
        %v917 = vld [vmem:[%s465] sm:$0xff]
        %v918 = vld [vmem:[%s465 + $0x8] sm:$0xff]
        %v919 = vld [vmem:[%s465 + $0x10] sm:$0xff]
        %v920 = vld [vmem:[%s465 + $0x18] sm:$0xff]
        %v921 = vld [vmem:[%s465 + $0x20] sm:$0xff]
        %v922 = vld [vmem:[%s465 + $0x28] sm:$0xff]
        %v923 = vld [vmem:[%s465 + $0x30] sm:$0xff]
        %v924 = vld [vmem:[%s465 + $0x38] sm:$0xff]
        %v925 = vld [vmem:[%s465 + $0x40] sm:$0xff]
        %v926 = vld [vmem:[%s465 + $0x48] sm:$0xff]
        %v927 = vld [vmem:[%s465 + $0x50] sm:$0xff]
        %v928 = vld [vmem:[%s465 + $0x58] sm:$0xff]
        %v929 = vld [vmem:[%s465 + $0x60] sm:$0xff]
        %v930 = vld [vmem:[%s465 + $0x68] sm:$0xff]
        %v931 = vld [vmem:[%s465 + $0x70] sm:$0xff]
        %v932 = vld [vmem:[%s465 + $0x78] sm:$0xff]
        %949 = vrot.lane.b32.xlu0 %v917, 32
        %v950 = vpop.permute.xlu0 %949
        %951 = vrot.lane.b32.xlu0 %v918, 32
        %v952 = vpop.permute.xlu0 %951
        %953 = vrot.lane.b32.xlu0 %v919, 32
        %v954 = vpop.permute.xlu0 %953
        %955 = vrot.lane.b32.xlu0 %v920, 32
        %v956 = vpop.permute.xlu0 %955
        %957 = vrot.lane.b32.xlu0 %v921, 32
        %v958 = vpop.permute.xlu0 %957
        %959 = vrot.lane.b32.xlu0 %v922, 32
        %v960 = vpop.permute.xlu0 %959
        %961 = vrot.lane.b32.xlu0 %v923, 32
        %v962 = vpop.permute.xlu0 %961
        %963 = vrot.lane.b32.xlu0 %v924, 32
        %v964 = vpop.permute.xlu0 %963
        %965 = vrot.lane.b32.xlu0 %v925, 32
        %v966 = vpop.permute.xlu0 %965
        %967 = vrot.lane.b32.xlu0 %v926, 32
        %v968 = vpop.permute.xlu0 %967
        %969 = vrot.lane.b32.xlu0 %v927, 32
        %v970 = vpop.permute.xlu0 %969
        %971 = vrot.lane.b32.xlu0 %v928, 32
        %v972 = vpop.permute.xlu0 %971
        %973 = vrot.lane.b32.xlu0 %v929, 32
        %v974 = vpop.permute.xlu0 %973
        %975 = vrot.lane.b32.xlu0 %v930, 32
        %v976 = vpop.permute.xlu0 %975
        %977 = vrot.lane.b32.xlu0 %v931, 32
        %v978 = vpop.permute.xlu0 %977
        %979 = vrot.lane.b32.xlu0 %v932, 32
        %v980 = vpop.permute.xlu0 %979
        %v997 = vmul.f32 %v886, %v950
        %v998 = vmul.f32 %v888, %v952
        %v999 = vmul.f32 %v890, %v954
        %v1000 = vmul.f32 %v892, %v956
        %v1001 = vmul.f32 %v894, %v958
        %v1002 = vmul.f32 %v896, %v960
        %v1003 = vmul.f32 %v898, %v962
        %v1004 = vmul.f32 %v900, %v964
        %v1005 = vmul.f32 %v902, %v966
        %v1006 = vmul.f32 %v904, %v968
        %v1007 = vmul.f32 %v906, %v970
        %v1008 = vmul.f32 %v908, %v972
        %v1009 = vmul.f32 %v910, %v974
        %v1010 = vmul.f32 %v912, %v976
        %v1011 = vmul.f32 %v914, %v978
        %v1012 = vmul.f32 %v916, %v980
        %1029 = vrot.lane.b32.xlu0 %v791, 32
        %v1030 = vpop.permute.xlu0 %1029
        %1031 = vrot.lane.b32.xlu0 %v796, 32
        %v1032 = vpop.permute.xlu0 %1031
        %1033 = vrot.lane.b32.xlu0 %v801, 32
        %v1034 = vpop.permute.xlu0 %1033
        %1035 = vrot.lane.b32.xlu0 %v806, 32
        %v1036 = vpop.permute.xlu0 %1035
        %1037 = vrot.lane.b32.xlu0 %v811, 32
        %v1038 = vpop.permute.xlu0 %1037
        %1039 = vrot.lane.b32.xlu0 %v816, 32
        %v1040 = vpop.permute.xlu0 %1039
        %1041 = vrot.lane.b32.xlu0 %v821, 32
        %v1042 = vpop.permute.xlu0 %1041
        %1043 = vrot.lane.b32.xlu0 %v826, 32
        %v1044 = vpop.permute.xlu0 %1043
        %1045 = vrot.lane.b32.xlu0 %v831, 32
        %v1046 = vpop.permute.xlu0 %1045
        %1047 = vrot.lane.b32.xlu0 %v836, 32
        %v1048 = vpop.permute.xlu0 %1047
        %1049 = vrot.lane.b32.xlu0 %v841, 32
        %v1050 = vpop.permute.xlu0 %1049
        %1051 = vrot.lane.b32.xlu0 %v846, 32
        %v1052 = vpop.permute.xlu0 %1051
        %1053 = vrot.lane.b32.xlu0 %v851, 32
        %v1054 = vpop.permute.xlu0 %1053
        %1055 = vrot.lane.b32.xlu0 %v856, 32
        %v1056 = vpop.permute.xlu0 %1055
        %1057 = vrot.lane.b32.xlu0 %v861, 32
        %v1058 = vpop.permute.xlu0 %1057
        %1059 = vrot.lane.b32.xlu0 %v866, 32
        %v1060 = vpop.permute.xlu0 %1059
        %v1077 = vadd.f32 %v997, %v1030
        %v1078 = vadd.f32 %v998, %v1032
        %v1079 = vadd.f32 %v999, %v1034
        %v1080 = vadd.f32 %v1000, %v1036
        %v1081 = vadd.f32 %v1001, %v1038
        %v1082 = vadd.f32 %v1002, %v1040
        %v1083 = vadd.f32 %v1003, %v1042
        %v1084 = vadd.f32 %v1004, %v1044
        %v1085 = vadd.f32 %v1005, %v1046
        %v1086 = vadd.f32 %v1006, %v1048
        %v1087 = vadd.f32 %v1007, %v1050
        %v1088 = vadd.f32 %v1008, %v1052
        %v1089 = vadd.f32 %v1009, %v1054
        %v1090 = vadd.f32 %v1010, %v1056
        %v1091 = vadd.f32 %v1011, %v1058
        %v1092 = vadd.f32 %v1012, %v1060
        %v1093 = vld [vmem:[#allocation5] sm:$0xff]
        %v1094 = vld [vmem:[#allocation5 + $0x8] sm:$0xff]
        %v1095 = vld [vmem:[#allocation5 + $0x10] sm:$0xff]
        %v1096 = vld [vmem:[#allocation5 + $0x18] sm:$0xff]
        %v1097 = vld [vmem:[%s7] sm:$0x1]
        %v1099 = vlaneseq
        %v1100 = vshrl.u32 %v1099, 7
        %v1101 = vsub.s32 0, %v1100
        %v1102 = vrot.slane %v1097, %v1101
        %1120 = vrot.lane.b32.xlu0 %v1077, 96
        %v1121 = vpop.permute.xlu0 %1120
        %1122 = vrot.lane.b32.xlu0 %v1078, 96
        %v1123 = vpop.permute.xlu0 %1122
        %1124 = vrot.lane.b32.xlu0 %v1079, 96
        %v1125 = vpop.permute.xlu0 %1124
        %1126 = vrot.lane.b32.xlu0 %v1080, 96
        %v1127 = vpop.permute.xlu0 %1126
        %1128 = vrot.lane.b32.xlu0 %v1081, 96
        %v1129 = vpop.permute.xlu0 %1128
        %1130 = vrot.lane.b32.xlu0 %v1082, 96
        %v1131 = vpop.permute.xlu0 %1130
        %1132 = vrot.lane.b32.xlu0 %v1083, 96
        %v1133 = vpop.permute.xlu0 %1132
        %1134 = vrot.lane.b32.xlu0 %v1084, 96
        %v1135 = vpop.permute.xlu0 %1134
        %1136 = vrot.lane.b32.xlu0 %v1085, 96
        %v1137 = vpop.permute.xlu0 %1136
        %1138 = vrot.lane.b32.xlu0 %v1086, 96
        %v1139 = vpop.permute.xlu0 %1138
        %1140 = vrot.lane.b32.xlu0 %v1087, 96
        %v1141 = vpop.permute.xlu0 %1140
        %1142 = vrot.lane.b32.xlu0 %v1088, 96
        %v1143 = vpop.permute.xlu0 %1142
        %1144 = vrot.lane.b32.xlu0 %v1089, 96
        %v1145 = vpop.permute.xlu0 %1144
        %1146 = vrot.lane.b32.xlu0 %v1090, 96
        %v1147 = vpop.permute.xlu0 %1146
        %1148 = vrot.lane.b32.xlu0 %v1091, 96
        %v1149 = vpop.permute.xlu0 %1148
        %1150 = vrot.lane.b32.xlu0 %v1092, 96
        %v1151 = vpop.permute.xlu0 %1150
        %vm1152 = vcmask 261120
        %v1153 = vsel %vm1152, %v1121, 0
        %v1155 = vsel %vm1152, %v1123, 0
        %v1157 = vsel %vm1152, %v1125, 0
        %v1159 = vsel %vm1152, %v1127, 0
        %v1161 = vsel %vm1152, %v1129, 0
        %v1163 = vsel %vm1152, %v1131, 0
        %v1165 = vsel %vm1152, %v1133, 0
        %v1167 = vsel %vm1152, %v1135, 0
        %v1169 = vsel %vm1152, %v1137, 0
        %v1171 = vsel %vm1152, %v1139, 0
        %v1173 = vsel %vm1152, %v1141, 0
        %v1175 = vsel %vm1152, %v1143, 0
        %v1177 = vsel %vm1152, %v1145, 0
        %v1179 = vsel %vm1152, %v1147, 0
        %v1181 = vsel %vm1152, %v1149, 0
        %v1183 = vsel %vm1152, %v1151, 0
        %1185 = vmatprep.subr.mxu0 0.0
        %1186 = vmatpush1.msra.mxu0 %v1093
        %1187 = vmatprep.subr.mxu0 0.0
        %1188 = vmatpush1.msra.mxu0 %v1094
        %1189 = vmatprep.subr.mxu0 0.0
        %1190 = vmatpush1.msra.mxu0 %v1095
        %1191 = vmatprep.subr.mxu0 0.0
        %1192 = vmatpush1.msra.mxu0 %v1096
        %1193 = vmatprep.subr.mxu0 0.0
        %1194 = vmatpush1.msra.mxu0 0.0
        %1195 = vmatprep.subr.mxu0 0.0
        %1196 = vmatpush1.msra.mxu0 0.0
        %1197 = vmatprep.subr.mxu0 0.0
        %1198 = vmatpush1.msra.mxu0 0.0
        %1199 = vmatprep.subr.mxu0 0.0
        %1200 = vmatpush1.msra.mxu0 0.0
        %1201 = vmatprep.subr.mxu0 0.0
        %1202 = vmatpush1.msra.mxu0 0.0
        %1203 = vmatprep.subr.mxu0 0.0
        %1204 = vmatpush1.msra.mxu0 0.0
        %1205 = vmatprep.subr.mxu0 0.0
        %1206 = vmatpush1.msra.mxu0 0.0
        %1207 = vmatprep.subr.mxu0 0.0
        %1208 = vmatpush1.msra.mxu0 0.0
        %1209 = vmatprep.subr.mxu0 0.0
        %1210 = vmatpush1.msra.mxu0 0.0
        %1211 = vmatprep.subr.mxu0 0.0
        %1212 = vmatpush1.msra.mxu0 0.0
        %1213 = vmatprep.subr.mxu0 0.0
        %1214 = vmatpush1.msra.mxu0 0.0
        %1215 = vmatprep.subr.mxu0 0.0
        %1216 = vmatpush1.msra.mxu0 0.0
        %1217 = vmatprep.subr.mxu0 0.0
        %1218 = vmatpush1.msra.mxu0 0.0
        %1219 = vmatprep.subr.mxu0 0.0
        %1220 = vmatpush1.msra.mxu0 0.0
        %1221 = vmatprep.subr.mxu0 0.0
        %1222 = vmatpush1.msra.mxu0 0.0
        %1223 = vmatprep.subr.mxu0 0.0
        %1224 = vmatpush1.msra.mxu0 0.0
        %1225 = vmatprep.subr.mxu0 0.0
        %1226 = vmatpush1.msra.mxu0 0.0
        %1227 = vmatprep.subr.mxu0 0.0
        %1228 = vmatpush1.msra.mxu0 0.0
        %1229 = vmatprep.subr.mxu0 0.0
        %1230 = vmatpush1.msra.mxu0 0.0
        %1231 = vmatprep.subr.mxu0 0.0
        %1232 = vmatpush1.msra.mxu0 0.0
        %1233 = vmatprep.subr.mxu0 0.0
        %1234 = vmatpush1.msra.mxu0 0.0
        %1235 = vmatprep.subr.mxu0 0.0
        %1236 = vmatpush1.msra.mxu0 0.0
        %1237 = vmatprep.subr.mxu0 0.0
        %1238 = vmatpush1.msra.mxu0 0.0
        %1239 = vmatprep.subr.mxu0 0.0
        %1240 = vmatpush1.msra.mxu0 0.0
        %1241 = vmatprep.subr.mxu0 0.0
        %1242 = vmatpush1.msra.mxu0 0.0
        %1243 = vmatprep.subr.mxu0 0.0
        %1244 = vmatpush1.msra.mxu0 0.0
        %1245 = vmatprep.subr.mxu0 0.0
        %1246 = vmatpush1.msra.mxu0 0.0
        %1247 = vmatprep.subr.mxu0 0.0
        %1248 = vmatpush1.msra.mxu0 0.0
        %1249 = vmatprep.mubr.f32.mxu0 0.0
        %1250 = vmatmul.mubr.f32.gmra.mrb[0].mxu0 %v1153
        %v1251 = vpop.f32.mrb[0].mxu0
        %v1252 = vadd.f32 %v1102, %v1251
        %v1253 = vpop.f32.mrb[0].mxu0
        %1254 = vmatprep.mubr.f32.mxu0 0.0
        %1255 = vmatmul.mubr.f32.gmra.mrb[0].mxu0 %v1155
        %v1256 = vpop.f32.mrb[0].mxu0
        %v1257 = vadd.f32 %v1102, %v1256
        %v1258 = vpop.f32.mrb[0].mxu0
        %1259 = vmatprep.mubr.f32.mxu0 0.0
        %1260 = vmatmul.mubr.f32.gmra.mrb[0].mxu0 %v1157
        %v1261 = vpop.f32.mrb[0].mxu0
        %v1262 = vadd.f32 %v1102, %v1261
        %v1263 = vpop.f32.mrb[0].mxu0
        %1264 = vmatprep.mubr.f32.mxu0 0.0
        %1265 = vmatmul.mubr.f32.gmra.mrb[0].mxu0 %v1159
        %v1266 = vpop.f32.mrb[0].mxu0
        %v1267 = vadd.f32 %v1102, %v1266
        %v1268 = vpop.f32.mrb[0].mxu0
        %1269 = vmatprep.mubr.f32.mxu0 0.0
        %1270 = vmatmul.mubr.f32.gmra.mrb[0].mxu0 %v1161
        %v1271 = vpop.f32.mrb[0].mxu0
        %v1272 = vadd.f32 %v1102, %v1271
        %v1273 = vpop.f32.mrb[0].mxu0
        %1274 = vmatprep.mubr.f32.mxu0 0.0
        %1275 = vmatmul.mubr.f32.gmra.mrb[0].mxu0 %v1163
        %v1276 = vpop.f32.mrb[0].mxu0
        %v1277 = vadd.f32 %v1102, %v1276
        %v1278 = vpop.f32.mrb[0].mxu0
        %1279 = vmatprep.mubr.f32.mxu0 0.0
        %1280 = vmatmul.mubr.f32.gmra.mrb[0].mxu0 %v1165
        %v1281 = vpop.f32.mrb[0].mxu0
        %v1282 = vadd.f32 %v1102, %v1281
        %v1283 = vpop.f32.mrb[0].mxu0
        %1284 = vmatprep.mubr.f32.mxu0 0.0
        %1285 = vmatmul.mubr.f32.gmra.mrb[0].mxu0 %v1167
        %v1286 = vpop.f32.mrb[0].mxu0
        %v1287 = vadd.f32 %v1102, %v1286
        %v1288 = vpop.f32.mrb[0].mxu0
        %1289 = vmatprep.mubr.f32.mxu0 0.0
        %1290 = vmatmul.mubr.f32.gmra.mrb[0].mxu0 %v1169
        %v1291 = vpop.f32.mrb[0].mxu0
        %v1292 = vadd.f32 %v1102, %v1291
        %v1293 = vpop.f32.mrb[0].mxu0
        %1294 = vmatprep.mubr.f32.mxu0 0.0
        %1295 = vmatmul.mubr.f32.gmra.mrb[0].mxu0 %v1171
        %v1296 = vpop.f32.mrb[0].mxu0
        %v1297 = vadd.f32 %v1102, %v1296
        %v1298 = vpop.f32.mrb[0].mxu0
        %1299 = vmatprep.mubr.f32.mxu0 0.0
        %1300 = vmatmul.mubr.f32.gmra.mrb[0].mxu0 %v1173
        %v1301 = vpop.f32.mrb[0].mxu0
        %v1302 = vadd.f32 %v1102, %v1301
        %v1303 = vpop.f32.mrb[0].mxu0
        %1304 = vmatprep.mubr.f32.mxu0 0.0
        %1305 = vmatmul.mubr.f32.gmra.mrb[0].mxu0 %v1175
        %v1306 = vpop.f32.mrb[0].mxu0
        %v1307 = vadd.f32 %v1102, %v1306
        %v1308 = vpop.f32.mrb[0].mxu0
        %1309 = vmatprep.mubr.f32.mxu0 0.0
        %1310 = vmatmul.mubr.f32.gmra.mrb[0].mxu0 %v1177
        %v1311 = vpop.f32.mrb[0].mxu0
        %v1312 = vadd.f32 %v1102, %v1311
        %v1313 = vpop.f32.mrb[0].mxu0
        %1314 = vmatprep.mubr.f32.mxu0 0.0
        %1315 = vmatmul.mubr.f32.gmra.mrb[0].mxu0 %v1179
        %v1316 = vpop.f32.mrb[0].mxu0
        %v1317 = vadd.f32 %v1102, %v1316
        %v1318 = vpop.f32.mrb[0].mxu0
        %1319 = vmatprep.mubr.f32.mxu0 0.0
        %1320 = vmatmul.mubr.f32.gmra.mrb[0].mxu0 %v1181
        %v1321 = vpop.f32.mrb[0].mxu0
        %v1322 = vadd.f32 %v1102, %v1321
        %v1323 = vpop.f32.mrb[0].mxu0
        %1324 = vmatprep.mubr.f32.mxu0 0.0
        %1325 = vmatmul.mubr.f32.gmra.mrb[0].mxu0 %v1183
        %v1326 = vpop.f32.mrb[0].mxu0
        %v1327 = vadd.f32 %v1102, %v1326
        %v1328 = vpop.f32.mrb[0].mxu0
        %1329 = vdwg.mxu0
        %v1330 = vtanh.pop %v1252
        %v1331 = vtanh.pop %v1257
        %v1332 = vtanh.pop %v1262
        %v1333 = vtanh.pop %v1267
        %v1334 = vtanh.pop %v1272
        %v1335 = vtanh.pop %v1277
        %v1336 = vtanh.pop %v1282
        %v1337 = vtanh.pop %v1287
        %v1338 = vtanh.pop %v1292
        %v1339 = vtanh.pop %v1297
        %v1340 = vtanh.pop %v1302
        %v1341 = vtanh.pop %v1307
        %v1342 = vtanh.pop %v1312
        %v1343 = vtanh.pop %v1317
        %v1344 = vtanh.pop %v1322
        %v1345 = vtanh.pop %v1327
        %v1346 = vld [vmem:[#allocation7] sm:$0xff]
        %v1347 = vld [vmem:[#allocation7 + $0x8] sm:$0xff]
        %v1348 = vld [vmem:[#allocation7 + $0x10] sm:$0xff]
        %v1349 = vld [vmem:[#allocation7 + $0x18] sm:$0xff]
        %v1350 = vld [vmem:[#allocation7 + $0x20] sm:$0xff]
        %v1351 = vld [vmem:[#allocation7 + $0x28] sm:$0xff]
        %v1352 = vld [vmem:[#allocation7 + $0x30] sm:$0xff]
        %v1353 = vld [vmem:[#allocation7 + $0x38] sm:$0xff]
        %v1354 = vld [vmem:[#allocation7 + $0x40] sm:$0xff]
        %v1355 = vld [vmem:[#allocation7 + $0x48] sm:$0xff]
        %v1356 = vld [vmem:[#allocation7 + $0x50] sm:$0xff]
        %v1357 = vld [vmem:[#allocation7 + $0x58] sm:$0xff]
        %v1358 = vld [vmem:[#allocation7 + $0x60] sm:$0xff]
        %v1359 = vld [vmem:[#allocation7 + $0x68] sm:$0xff]
        %v1360 = vld [vmem:[#allocation7 + $0x70] sm:$0xff]
        %v1361 = vld [vmem:[#allocation7 + $0x78] sm:$0xff]
        %v1362 = vld [vmem:[#allocation7 + $0x80] sm:$0xff]
        %v1363 = vld [vmem:[#allocation7 + $0x88] sm:$0xff]
        %v1364 = vld [vmem:[#allocation7 + $0x90] sm:$0xff]
        %v1365 = vld [vmem:[#allocation7 + $0x98] sm:$0xff]
        %v1366 = vld [vmem:[#allocation7 + $0xa0] sm:$0xff]
        %v1367 = vld [vmem:[#allocation7 + $0xa8] sm:$0xff]
        %v1368 = vld [vmem:[#allocation7 + $0xb0] sm:$0xff]
        %v1369 = vld [vmem:[#allocation7 + $0xb8] sm:$0xff]
        %v1370 = vld [vmem:[#allocation7 + $0xc0] sm:$0xff]
        %v1371 = vld [vmem:[#allocation7 + $0xc8] sm:$0xff]
        %v1372 = vld [vmem:[#allocation7 + $0xd0] sm:$0xff]
        %v1373 = vld [vmem:[#allocation7 + $0xd8] sm:$0xff]
        %v1374 = vld [vmem:[#allocation7 + $0xe0] sm:$0xff]
        %v1375 = vld [vmem:[#allocation7 + $0xe8] sm:$0xff]
        %v1376 = vld [vmem:[#allocation7 + $0xf0] sm:$0xff]
        %v1377 = vld [vmem:[#allocation7 + $0xf8] sm:$0xff]
        %v1378 = vld [vmem:[%s9] sm:$0x3]
        %v1380 = vlaneseq
        %v1381 = vshrl.u32 %v1380, 7
        %v1382 = vsub.s32 0, %v1381
        %v1383 = vrot.slane %v1378, %v1382
        %v1384 = vlaneseq
        %v1385 = vshrl.u32 %v1384, 7
        %v1386 = vsub.s32 1, %v1385
        %v1387 = vrot.slane %v1378, %v1386
        %1390 = vmatprep.subr.mxu0 %v1347
        %1391 = vmatpush1.msra.mxu0 %v1346
        %1392 = vmatprep.subr.mxu0 %v1349
        %1393 = vmatpush1.msra.mxu0 %v1348
        %1394 = vmatprep.subr.mxu0 %v1351
        %1395 = vmatpush1.msra.mxu0 %v1350
        %1396 = vmatprep.subr.mxu0 %v1353
        %1397 = vmatpush1.msra.mxu0 %v1352
        %1398 = vmatprep.subr.mxu0 %v1355
        %1399 = vmatpush1.msra.mxu0 %v1354
        %1400 = vmatprep.subr.mxu0 %v1357
        %1401 = vmatpush1.msra.mxu0 %v1356
        %1402 = vmatprep.subr.mxu0 %v1359
        %1403 = vmatpush1.msra.mxu0 %v1358
        %1404 = vmatprep.subr.mxu0 %v1361
        %1405 = vmatpush1.msra.mxu0 %v1360
        %1406 = vmatprep.subr.mxu0 %v1363
        %1407 = vmatpush1.msra.mxu0 %v1362
        %1408 = vmatprep.subr.mxu0 %v1365
        %1409 = vmatpush1.msra.mxu0 %v1364
        %1410 = vmatprep.subr.mxu0 %v1367
        %1411 = vmatpush1.msra.mxu0 %v1366
        %1412 = vmatprep.subr.mxu0 %v1369
        %1413 = vmatpush1.msra.mxu0 %v1368
        %1414 = vmatprep.subr.mxu0 %v1371
        %1415 = vmatpush1.msra.mxu0 %v1370
        %1416 = vmatprep.subr.mxu0 %v1373
        %1417 = vmatpush1.msra.mxu0 %v1372
        %1418 = vmatprep.subr.mxu0 %v1375
        %1419 = vmatpush1.msra.mxu0 %v1374
        %1420 = vmatprep.subr.mxu0 %v1377
        %1421 = vmatpush1.msra.mxu0 %v1376
        %1422 = vmatprep.subr.mxu0 0.0
        %1423 = vmatpush1.msra.mxu0 0.0
        %1424 = vmatprep.subr.mxu0 0.0
        %1425 = vmatpush1.msra.mxu0 0.0
        %1426 = vmatprep.subr.mxu0 0.0
        %1427 = vmatpush1.msra.mxu0 0.0
        %1428 = vmatprep.subr.mxu0 0.0
        %1429 = vmatpush1.msra.mxu0 0.0
        %1430 = vmatprep.subr.mxu0 0.0
        %1431 = vmatpush1.msra.mxu0 0.0
        %1432 = vmatprep.subr.mxu0 0.0
        %1433 = vmatpush1.msra.mxu0 0.0
        %1434 = vmatprep.subr.mxu0 0.0
        %1435 = vmatpush1.msra.mxu0 0.0
        %1436 = vmatprep.subr.mxu0 0.0
        %1437 = vmatpush1.msra.mxu0 0.0
        %1438 = vmatprep.subr.mxu0 0.0
        %1439 = vmatpush1.msra.mxu0 0.0
        %1440 = vmatprep.subr.mxu0 0.0
        %1441 = vmatpush1.msra.mxu0 0.0
        %1442 = vmatprep.subr.mxu0 0.0
        %1443 = vmatpush1.msra.mxu0 0.0
        %1444 = vmatprep.subr.mxu0 0.0
        %1445 = vmatpush1.msra.mxu0 0.0
        %1446 = vmatprep.subr.mxu0 0.0
        %1447 = vmatpush1.msra.mxu0 0.0
        %1448 = vmatprep.subr.mxu0 0.0
        %1449 = vmatpush1.msra.mxu0 0.0
        %1450 = vmatprep.subr.mxu0 0.0
        %1451 = vmatpush1.msra.mxu0 0.0
        %1452 = vmatprep.subr.mxu0 0.0
        %1453 = vmatpush1.msra.mxu0 0.0
        %1454 = vmatprep.mubr.f32.mxu0 0.0
        %1455 = vmatmul.mubr.f32.gmra.mrb[0].mxu0 %v1330
        %v1456 = vpop.f32.mrb[0].mxu0
        %v1457 = vadd.f32 %v1383, %v1456
        %v1458 = vpop.f32.mrb[0].mxu0
        %v1459 = vadd.f32 %v1387, %v1458
        %1460 = vmatprep.mubr.f32.mxu0 0.0
        %1461 = vmatmul.mubr.f32.gmra.mrb[0].mxu0 %v1331
        %v1462 = vpop.f32.mrb[0].mxu0
        %v1463 = vadd.f32 %v1383, %v1462
        %v1464 = vpop.f32.mrb[0].mxu0
        %v1465 = vadd.f32 %v1387, %v1464
        %1466 = vmatprep.mubr.f32.mxu0 0.0
        %1467 = vmatmul.mubr.f32.gmra.mrb[0].mxu0 %v1332
        %v1468 = vpop.f32.mrb[0].mxu0
        %v1469 = vadd.f32 %v1383, %v1468
        %v1470 = vpop.f32.mrb[0].mxu0
        %v1471 = vadd.f32 %v1387, %v1470
        %1472 = vmatprep.mubr.f32.mxu0 0.0
        %1473 = vmatmul.mubr.f32.gmra.mrb[0].mxu0 %v1333
        %v1474 = vpop.f32.mrb[0].mxu0
        %v1475 = vadd.f32 %v1383, %v1474
        %v1476 = vpop.f32.mrb[0].mxu0
        %v1477 = vadd.f32 %v1387, %v1476
        %1478 = vmatprep.mubr.f32.mxu0 0.0
        %1479 = vmatmul.mubr.f32.gmra.mrb[0].mxu0 %v1334
        %v1480 = vpop.f32.mrb[0].mxu0
        %v1481 = vadd.f32 %v1383, %v1480
        %v1482 = vpop.f32.mrb[0].mxu0
        %v1483 = vadd.f32 %v1387, %v1482
        %1484 = vmatprep.mubr.f32.mxu0 0.0
        %1485 = vmatmul.mubr.f32.gmra.mrb[0].mxu0 %v1335
        %v1486 = vpop.f32.mrb[0].mxu0
        %v1487 = vadd.f32 %v1383, %v1486
        %v1488 = vpop.f32.mrb[0].mxu0
        %v1489 = vadd.f32 %v1387, %v1488
        %1490 = vmatprep.mubr.f32.mxu0 0.0
        %1491 = vmatmul.mubr.f32.gmra.mrb[0].mxu0 %v1336
        %v1492 = vpop.f32.mrb[0].mxu0
        %v1493 = vadd.f32 %v1383, %v1492
        %v1494 = vpop.f32.mrb[0].mxu0
        %v1495 = vadd.f32 %v1387, %v1494
        %1496 = vmatprep.mubr.f32.mxu0 0.0
        %1497 = vmatmul.mubr.f32.gmra.mrb[0].mxu0 %v1337
        %v1498 = vpop.f32.mrb[0].mxu0
        %v1499 = vadd.f32 %v1383, %v1498
        %v1500 = vpop.f32.mrb[0].mxu0
        %v1501 = vadd.f32 %v1387, %v1500
        %1502 = vmatprep.mubr.f32.mxu0 0.0
        %1503 = vmatmul.mubr.f32.gmra.mrb[0].mxu0 %v1338
        %v1504 = vpop.f32.mrb[0].mxu0
        %v1505 = vadd.f32 %v1383, %v1504
        %v1506 = vpop.f32.mrb[0].mxu0
        %v1507 = vadd.f32 %v1387, %v1506
        %1508 = vmatprep.mubr.f32.mxu0 0.0
        %1509 = vmatmul.mubr.f32.gmra.mrb[0].mxu0 %v1339
        %v1510 = vpop.f32.mrb[0].mxu0
        %v1511 = vadd.f32 %v1383, %v1510
        %v1512 = vpop.f32.mrb[0].mxu0
        %v1513 = vadd.f32 %v1387, %v1512
        %1514 = vmatprep.mubr.f32.mxu0 0.0
        %1515 = vmatmul.mubr.f32.gmra.mrb[0].mxu0 %v1340
        %v1516 = vpop.f32.mrb[0].mxu0
        %v1517 = vadd.f32 %v1383, %v1516
        %v1518 = vpop.f32.mrb[0].mxu0
        %v1519 = vadd.f32 %v1387, %v1518
        %1520 = vmatprep.mubr.f32.mxu0 0.0
        %1521 = vmatmul.mubr.f32.gmra.mrb[0].mxu0 %v1341
        %v1522 = vpop.f32.mrb[0].mxu0
        %v1523 = vadd.f32 %v1383, %v1522
        %v1524 = vpop.f32.mrb[0].mxu0
        %v1525 = vadd.f32 %v1387, %v1524
        %1526 = vmatprep.mubr.f32.mxu0 0.0
        %1527 = vmatmul.mubr.f32.gmra.mrb[0].mxu0 %v1342
        %v1528 = vpop.f32.mrb[0].mxu0
        %v1529 = vadd.f32 %v1383, %v1528
        %v1530 = vpop.f32.mrb[0].mxu0
        %v1531 = vadd.f32 %v1387, %v1530
        %1532 = vmatprep.mubr.f32.mxu0 0.0
        %1533 = vmatmul.mubr.f32.gmra.mrb[0].mxu0 %v1343
        %v1534 = vpop.f32.mrb[0].mxu0
        %v1535 = vadd.f32 %v1383, %v1534
        %v1536 = vpop.f32.mrb[0].mxu0
        %v1537 = vadd.f32 %v1387, %v1536
        %1538 = vmatprep.mubr.f32.mxu0 0.0
        %1539 = vmatmul.mubr.f32.gmra.mrb[0].mxu0 %v1344
        %v1540 = vpop.f32.mrb[0].mxu0
        %v1541 = vadd.f32 %v1383, %v1540
        %v1542 = vpop.f32.mrb[0].mxu0
        %v1543 = vadd.f32 %v1387, %v1542
        %1544 = vmatprep.mubr.f32.mxu0 0.0
        %1545 = vmatmul.mubr.f32.gmra.mrb[0].mxu0 %v1345
        %v1546 = vpop.f32.mrb[0].mxu0
        %v1547 = vadd.f32 %v1383, %v1546
        %v1548 = vpop.f32.mrb[0].mxu0
        %v1549 = vadd.f32 %v1387, %v1548
        %1550 = vdwg.mxu0
        %v1551 = vxor.u32 %v1457, 2147483648
        %v1552 = vxor.u32 %v1459, 2147483648
        %v1553 = vxor.u32 %v1463, 2147483648
        %v1554 = vxor.u32 %v1465, 2147483648
        %v1555 = vxor.u32 %v1469, 2147483648
        %v1556 = vxor.u32 %v1471, 2147483648
        %v1557 = vxor.u32 %v1475, 2147483648
        %v1558 = vxor.u32 %v1477, 2147483648
        %v1559 = vxor.u32 %v1481, 2147483648
        %v1560 = vxor.u32 %v1483, 2147483648
        %v1561 = vxor.u32 %v1487, 2147483648
        %v1562 = vxor.u32 %v1489, 2147483648
        %v1563 = vxor.u32 %v1493, 2147483648
        %v1564 = vxor.u32 %v1495, 2147483648
        %v1565 = vxor.u32 %v1499, 2147483648
        %v1566 = vxor.u32 %v1501, 2147483648
        %v1567 = vxor.u32 %v1505, 2147483648
        %v1568 = vxor.u32 %v1507, 2147483648
        %v1569 = vxor.u32 %v1511, 2147483648
        %v1570 = vxor.u32 %v1513, 2147483648
        %v1571 = vxor.u32 %v1517, 2147483648
        %v1572 = vxor.u32 %v1519, 2147483648
        %v1573 = vxor.u32 %v1523, 2147483648
        %v1574 = vxor.u32 %v1525, 2147483648
        %v1575 = vxor.u32 %v1529, 2147483648
        %v1576 = vxor.u32 %v1531, 2147483648
        %v1577 = vxor.u32 %v1535, 2147483648
        %v1578 = vxor.u32 %v1537, 2147483648
        %v1579 = vxor.u32 %v1541, 2147483648
        %v1580 = vxor.u32 %v1543, 2147483648
        %v1581 = vxor.u32 %v1547, 2147483648
        %v1582 = vxor.u32 %v1549, 2147483648
        %v1583 = vmul.f32 %v1551, 1.442695
        %v1584 = vpow.pop %v1583
        %v1585 = vmul.f32 %v1552, 1.442695
        %v1586 = vpow.pop %v1585
        %v1587 = vmul.f32 %v1553, 1.442695
        %v1588 = vpow.pop %v1587
        %v1589 = vmul.f32 %v1554, 1.442695
        %v1590 = vpow.pop %v1589
        %v1591 = vmul.f32 %v1555, 1.442695
        %v1592 = vpow.pop %v1591
        %v1593 = vmul.f32 %v1556, 1.442695
        %v1594 = vpow.pop %v1593
        %v1595 = vmul.f32 %v1557, 1.442695
        %v1596 = vpow.pop %v1595
        %v1597 = vmul.f32 %v1558, 1.442695
        %v1598 = vpow.pop %v1597
        %v1599 = vmul.f32 %v1559, 1.442695
        %v1600 = vpow.pop %v1599
        %v1601 = vmul.f32 %v1560, 1.442695
        %v1602 = vpow.pop %v1601
        %v1603 = vmul.f32 %v1561, 1.442695
        %v1604 = vpow.pop %v1603
        %v1605 = vmul.f32 %v1562, 1.442695
        %v1606 = vpow.pop %v1605
        %v1607 = vmul.f32 %v1563, 1.442695
        %v1608 = vpow.pop %v1607
        %v1609 = vmul.f32 %v1564, 1.442695
        %v1610 = vpow.pop %v1609
        %v1611 = vmul.f32 %v1565, 1.442695
        %v1612 = vpow.pop %v1611
        %v1613 = vmul.f32 %v1566, 1.442695
        %v1614 = vpow.pop %v1613
        %v1615 = vmul.f32 %v1567, 1.442695
        %v1616 = vpow.pop %v1615
        %v1617 = vmul.f32 %v1568, 1.442695
        %v1618 = vpow.pop %v1617
        %v1619 = vmul.f32 %v1569, 1.442695
        %v1620 = vpow.pop %v1619
        %v1621 = vmul.f32 %v1570, 1.442695
        %v1622 = vpow.pop %v1621
        %v1623 = vmul.f32 %v1571, 1.442695
        %v1624 = vpow.pop %v1623
        %v1625 = vmul.f32 %v1572, 1.442695
        %v1626 = vpow.pop %v1625
        %v1627 = vmul.f32 %v1573, 1.442695
        %v1628 = vpow.pop %v1627
        %v1629 = vmul.f32 %v1574, 1.442695
        %v1630 = vpow.pop %v1629
        %v1631 = vmul.f32 %v1575, 1.442695
        %v1632 = vpow.pop %v1631
        %v1633 = vmul.f32 %v1576, 1.442695
        %v1634 = vpow.pop %v1633
        %v1635 = vmul.f32 %v1577, 1.442695
        %v1636 = vpow.pop %v1635
        %v1637 = vmul.f32 %v1578, 1.442695
        %v1638 = vpow.pop %v1637
        %v1639 = vmul.f32 %v1579, 1.442695
        %v1640 = vpow.pop %v1639
        %v1641 = vmul.f32 %v1580, 1.442695
        %v1642 = vpow.pop %v1641
        %v1643 = vmul.f32 %v1581, 1.442695
        %v1644 = vpow.pop %v1643
        %v1645 = vmul.f32 %v1582, 1.442695
        %v1646 = vpow.pop %v1645
        %v1647 = vadd.f32 %v1584, 1.0
        %v1648 = vadd.f32 %v1586, 1.0
        %v1649 = vadd.f32 %v1588, 1.0
        %v1650 = vadd.f32 %v1590, 1.0
        %v1651 = vadd.f32 %v1592, 1.0
        %v1652 = vadd.f32 %v1594, 1.0
        %v1653 = vadd.f32 %v1596, 1.0
        %v1654 = vadd.f32 %v1598, 1.0
        %v1655 = vadd.f32 %v1600, 1.0
        %v1656 = vadd.f32 %v1602, 1.0
        %v1657 = vadd.f32 %v1604, 1.0
        %v1658 = vadd.f32 %v1606, 1.0
        %v1659 = vadd.f32 %v1608, 1.0
        %v1660 = vadd.f32 %v1610, 1.0
        %v1661 = vadd.f32 %v1612, 1.0
        %v1662 = vadd.f32 %v1614, 1.0
        %v1663 = vadd.f32 %v1616, 1.0
        %v1664 = vadd.f32 %v1618, 1.0
        %v1665 = vadd.f32 %v1620, 1.0
        %v1666 = vadd.f32 %v1622, 1.0
        %v1667 = vadd.f32 %v1624, 1.0
        %v1668 = vadd.f32 %v1626, 1.0
        %v1669 = vadd.f32 %v1628, 1.0
        %v1670 = vadd.f32 %v1630, 1.0
        %v1671 = vadd.f32 %v1632, 1.0
        %v1672 = vadd.f32 %v1634, 1.0
        %v1673 = vadd.f32 %v1636, 1.0
        %v1674 = vadd.f32 %v1638, 1.0
        %v1675 = vadd.f32 %v1640, 1.0
        %v1676 = vadd.f32 %v1642, 1.0
        %v1677 = vadd.f32 %v1644, 1.0
        %v1678 = vadd.f32 %v1646, 1.0
        %v1679 = vrcp.pop %v1647
        %v1680 = vmul.f32 1.0, %v1679
        %v1681 = vrcp.pop %v1648
        %v1682 = vmul.f32 1.0, %v1681
        %v1683 = vrcp.pop %v1649
        %v1684 = vmul.f32 1.0, %v1683
        %v1685 = vrcp.pop %v1650
        %v1686 = vmul.f32 1.0, %v1685
        %v1687 = vrcp.pop %v1651
        %v1688 = vmul.f32 1.0, %v1687
        %v1689 = vrcp.pop %v1652
        %v1690 = vmul.f32 1.0, %v1689
        %v1691 = vrcp.pop %v1653
        %v1692 = vmul.f32 1.0, %v1691
        %v1693 = vrcp.pop %v1654
        %v1694 = vmul.f32 1.0, %v1693
        %v1695 = vrcp.pop %v1655
        %v1696 = vmul.f32 1.0, %v1695
        %v1697 = vrcp.pop %v1656
        %v1698 = vmul.f32 1.0, %v1697
        %v1699 = vrcp.pop %v1657
        %v1700 = vmul.f32 1.0, %v1699
        %v1701 = vrcp.pop %v1658
        %v1702 = vmul.f32 1.0, %v1701
        %v1703 = vrcp.pop %v1659
        %v1704 = vmul.f32 1.0, %v1703
        %v1705 = vrcp.pop %v1660
        %v1706 = vmul.f32 1.0, %v1705
        %v1707 = vrcp.pop %v1661
        %v1708 = vmul.f32 1.0, %v1707
        %v1709 = vrcp.pop %v1662
        %v1710 = vmul.f32 1.0, %v1709
        %v1711 = vrcp.pop %v1663
        %v1712 = vmul.f32 1.0, %v1711
        %v1713 = vrcp.pop %v1664
        %v1714 = vmul.f32 1.0, %v1713
        %v1715 = vrcp.pop %v1665
        %v1716 = vmul.f32 1.0, %v1715
        %v1717 = vrcp.pop %v1666
        %v1718 = vmul.f32 1.0, %v1717
        %v1719 = vrcp.pop %v1667
        %v1720 = vmul.f32 1.0, %v1719
        %v1721 = vrcp.pop %v1668
        %v1722 = vmul.f32 1.0, %v1721
        %v1723 = vrcp.pop %v1669
        %v1724 = vmul.f32 1.0, %v1723
        %v1725 = vrcp.pop %v1670
        %v1726 = vmul.f32 1.0, %v1725
        %v1727 = vrcp.pop %v1671
        %v1728 = vmul.f32 1.0, %v1727
        %v1729 = vrcp.pop %v1672
        %v1730 = vmul.f32 1.0, %v1729
        %v1731 = vrcp.pop %v1673
        %v1732 = vmul.f32 1.0, %v1731
        %v1733 = vrcp.pop %v1674
        %v1734 = vmul.f32 1.0, %v1733
        %v1735 = vrcp.pop %v1675
        %v1736 = vmul.f32 1.0, %v1735
        %v1737 = vrcp.pop %v1676
        %v1738 = vmul.f32 1.0, %v1737
        %v1739 = vrcp.pop %v1677
        %v1740 = vmul.f32 1.0, %v1739
        %v1741 = vrcp.pop %v1678
        %v1742 = vmul.f32 1.0, %v1741
        %1743 = vst [vmem:[%s453] sm:$0xff] %v1680
        %1744 = vst [vmem:[%s453 + $0x8] sm:$0xff] %v1682
        %1745 = vst [vmem:[%s453 + $0x10] sm:$0xff] %v1684
        %1746 = vst [vmem:[%s453 + $0x18] sm:$0xff] %v1686
        %1747 = vst [vmem:[%s453 + $0x20] sm:$0xff] %v1688
        %1748 = vst [vmem:[%s453 + $0x28] sm:$0xff] %v1690
        %1749 = vst [vmem:[%s453 + $0x30] sm:$0xff] %v1692
        %1750 = vst [vmem:[%s453 + $0x38] sm:$0xff] %v1694
        %1751 = vst [vmem:[%s453 + $0x40] sm:$0xff] %v1696
        %1752 = vst [vmem:[%s453 + $0x48] sm:$0xff] %v1698
        %1753 = vst [vmem:[%s453 + $0x50] sm:$0xff] %v1700
        %1754 = vst [vmem:[%s453 + $0x58] sm:$0xff] %v1702
        %1755 = vst [vmem:[%s453 + $0x60] sm:$0xff] %v1704
        %1756 = vst [vmem:[%s453 + $0x68] sm:$0xff] %v1706
        %1757 = vst [vmem:[%s453 + $0x70] sm:$0xff] %v1708
        %1758 = vst [vmem:[%s453 + $0x78] sm:$0xff] %v1710
        %1759 = vst [vmem:[%s453 + $0x80] sm:$0xff] %v1712
        %1760 = vst [vmem:[%s453 + $0x88] sm:$0xff] %v1714
        %1761 = vst [vmem:[%s453 + $0x90] sm:$0xff] %v1716
        %1762 = vst [vmem:[%s453 + $0x98] sm:$0xff] %v1718
        %1763 = vst [vmem:[%s453 + $0xa0] sm:$0xff] %v1720
        %1764 = vst [vmem:[%s453 + $0xa8] sm:$0xff] %v1722
        %1765 = vst [vmem:[%s453 + $0xb0] sm:$0xff] %v1724
        %1766 = vst [vmem:[%s453 + $0xb8] sm:$0xff] %v1726
        %1767 = vst [vmem:[%s453 + $0xc0] sm:$0xff] %v1728
        %1768 = vst [vmem:[%s453 + $0xc8] sm:$0xff] %v1730
        %1769 = vst [vmem:[%s453 + $0xd0] sm:$0xff] %v1732
        %1770 = vst [vmem:[%s453 + $0xd8] sm:$0xff] %v1734
        %1771 = vst [vmem:[%s453 + $0xe0] sm:$0xff] %v1736
        %1772 = vst [vmem:[%s453 + $0xe8] sm:$0xff] %v1738
        %1773 = vst [vmem:[%s453 + $0xf0] sm:$0xff] %v1740
        %1774 = vst [vmem:[%s453 + $0xf8] sm:$0xff] %v1742
        %1775 = vrot.lane.b32.xlu0 %v1077, 32
        %v1776 = vpop.permute.xlu0 %1775
        %1777 = vrot.lane.b32.xlu0 %v1078, 32
        %v1778 = vpop.permute.xlu0 %1777
        %1779 = vrot.lane.b32.xlu0 %v1079, 32
        %v1780 = vpop.permute.xlu0 %1779
        %1781 = vrot.lane.b32.xlu0 %v1080, 32
        %v1782 = vpop.permute.xlu0 %1781
        %1783 = vrot.lane.b32.xlu0 %v1081, 32
        %v1784 = vpop.permute.xlu0 %1783
        %1785 = vrot.lane.b32.xlu0 %v1082, 32
        %v1786 = vpop.permute.xlu0 %1785
        %1787 = vrot.lane.b32.xlu0 %v1083, 32
        %v1788 = vpop.permute.xlu0 %1787
        %1789 = vrot.lane.b32.xlu0 %v1084, 32
        %v1790 = vpop.permute.xlu0 %1789
        %1791 = vrot.lane.b32.xlu0 %v1085, 32
        %v1792 = vpop.permute.xlu0 %1791
        %1793 = vrot.lane.b32.xlu0 %v1086, 32
        %v1794 = vpop.permute.xlu0 %1793
        %1795 = vrot.lane.b32.xlu0 %v1087, 32
        %v1796 = vpop.permute.xlu0 %1795
        %1797 = vrot.lane.b32.xlu0 %v1088, 32
        %v1798 = vpop.permute.xlu0 %1797
        %1799 = vrot.lane.b32.xlu0 %v1089, 32
        %v1800 = vpop.permute.xlu0 %1799
        %1801 = vrot.lane.b32.xlu0 %v1090, 32
        %v1802 = vpop.permute.xlu0 %1801
        %1803 = vrot.lane.b32.xlu0 %v1091, 32
        %v1804 = vpop.permute.xlu0 %1803
        %1805 = vrot.lane.b32.xlu0 %v1092, 32
        %v1806 = vpop.permute.xlu0 %1805
        %vm1823 = vcmask 523264
        %v1824 = vsel %vm1823, %v791, %v1776
        %v1825 = vsel %vm1823, %v796, %v1778
        %v1826 = vsel %vm1823, %v801, %v1780
        %v1827 = vsel %vm1823, %v806, %v1782
        %v1828 = vsel %vm1823, %v811, %v1784
        %v1829 = vsel %vm1823, %v816, %v1786
        %v1830 = vsel %vm1823, %v821, %v1788
        %v1831 = vsel %vm1823, %v826, %v1790
        %v1832 = vsel %vm1823, %v831, %v1792
        %v1833 = vsel %vm1823, %v836, %v1794
        %v1834 = vsel %vm1823, %v841, %v1796
        %v1835 = vsel %vm1823, %v846, %v1798
        %v1836 = vsel %vm1823, %v851, %v1800
        %v1837 = vsel %vm1823, %v856, %v1802
        %v1838 = vsel %vm1823, %v861, %v1804
        %v1839 = vsel %vm1823, %v866, %v1806
        %vm1840 = vcmask 785408
        %v1841 = vsel %vm1840, %v1824, 0.0
        %v1842 = vsel %vm1840, %v1825, 0.0
        %v1843 = vsel %vm1840, %v1826, 0.0
        %v1844 = vsel %vm1840, %v1827, 0.0
        %v1845 = vsel %vm1840, %v1828, 0.0
        %v1846 = vsel %vm1840, %v1829, 0.0
        %v1847 = vsel %vm1840, %v1830, 0.0
        %v1848 = vsel %vm1840, %v1831, 0.0
        %v1849 = vsel %vm1840, %v1832, 0.0
        %v1850 = vsel %vm1840, %v1833, 0.0
        %v1851 = vsel %vm1840, %v1834, 0.0
        %v1852 = vsel %vm1840, %v1835, 0.0
        %v1853 = vsel %vm1840, %v1836, 0.0
        %v1854 = vsel %vm1840, %v1837, 0.0
        %v1855 = vsel %vm1840, %v1838, 0.0
        %v1856 = vsel %vm1840, %v1839, 0.0
        %1857 = vst [vmem:[%s446] sm:$0xff] %v1841
        %1858 = vst [vmem:[%s446 + $0x8] sm:$0xff] %v1842
        %1859 = vst [vmem:[%s446 + $0x10] sm:$0xff] %v1843
        %1860 = vst [vmem:[%s446 + $0x18] sm:$0xff] %v1844
        %1861 = vst [vmem:[%s446 + $0x20] sm:$0xff] %v1845
        %1862 = vst [vmem:[%s446 + $0x28] sm:$0xff] %v1846
        %1863 = vst [vmem:[%s446 + $0x30] sm:$0xff] %v1847
        %1864 = vst [vmem:[%s446 + $0x38] sm:$0xff] %v1848
        %1865 = vst [vmem:[%s446 + $0x40] sm:$0xff] %v1849
        %1866 = vst [vmem:[%s446 + $0x48] sm:$0xff] %v1850
        %1867 = vst [vmem:[%s446 + $0x50] sm:$0xff] %v1851
        %1868 = vst [vmem:[%s446 + $0x58] sm:$0xff] %v1852
        %1869 = vst [vmem:[%s446 + $0x60] sm:$0xff] %v1853
        %1870 = vst [vmem:[%s446 + $0x68] sm:$0xff] %v1854
        %1871 = vst [vmem:[%s446 + $0x70] sm:$0xff] %v1855
        %1872 = vst [vmem:[%s446 + $0x78] sm:$0xff] %v1856
        %s1873 = sand.u32 %s259, 1
        %s1874 = scalar_lea.sflag [#allocation4], %s1873
        %s1875 = sand.u32 %s259, 1
        %s1876 = smul.addr %s1875, 128
        %s1877 = scalar_lea.vmem [#allocation8], %s1876
        %s1878 = sand.u32 %s285, 1
        %s1879 = scalar_lea.sflag [#allocation10], %s1878
        %s1880 = sand.u32 %s285, 1
        %s1881 = smul.addr %s1880, 256
        %s1882 = scalar_lea.vmem [#allocation9], %s1881
        // Predicated region
        $region73: #{tpu_custom_call.1} parent=59 // pred_check
          %p1883 = pneg %p269
        $region74: #{tpu_custom_call.1} parent=59 // pred_check_branch
          %1885 = sbr.rel (%p1883) target = $region76
        $region75: #{tpu_custom_call.1} parent=59 // pred_region
          %s1886 = smul.u32 16, %s31
          %s1888 = ssub.s32 2048, 2048
          %1889 = vsyncadd %s1874, %s1888
          %s1890 = smul.addr %s1886, 128
          %s1891 = scalar_lea.hbm %s10, %s1890
          %s1892 = sshll.u32 %s1877, 4
          %s1893 = int_to_ptr.vmem [resolvable:$true] %s1892
          %1898 = dma.vmem_to_hbm [thread:$0]  %s1893, 2048, %s1891, %s1874, 128, 128, 8
        $region76: #{tpu_custom_call.1} parent=59 // pred_fallthru
          _
        // Predicated region
        $region77: #{tpu_custom_call.1} parent=59 // pred_check
          %p1899 = pneg %p295
        $region78: #{tpu_custom_call.1} parent=59 // pred_check_branch
          %1901 = sbr.rel (%p1899) target = $region80
        $region79: #{tpu_custom_call.1} parent=59 // pred_region
          %s1902 = smul.u32 16, %s31
          %s1904 = ssub.s32 4096, 4096
          %1905 = vsyncadd %s1879, %s1904
          %s1906 = smul.addr %s1902, 2
          %s1907 = smul.addr %s1906, 128
          %s1908 = scalar_lea.hbm %s11, %s1907
          %s1909 = sshll.u32 %s1882, 4
          %s1910 = int_to_ptr.vmem [resolvable:$true] %s1909
          %1915 = dma.vmem_to_hbm [thread:$0]  %s1910, 4096, %s1908, %s1879, 256, 256, 16
        $region80: #{tpu_custom_call.1} parent=59 // pred_fallthru
          _
      $region60: #{tpu_custom_call.1} parent=5 // pred_fallthru
        _
      %p1916 = scmp.le.s32.totalorder 2, %s26
      // Predicated region
      $region81: #{tpu_custom_call.1} parent=5 // pred_check
        %p1917 = pneg %p1916
      $region82: #{tpu_custom_call.1} parent=5 // pred_check_branch
        %1919 = sbr.rel (%p1917) target = $region84
      $region83: #{tpu_custom_call.1} parent=5 // pred_region
        %s1920 = ssub.s32 %s26, 2
        // Predicated region
        $region85: #{tpu_custom_call.1} parent=83 // pred_check
          %p1921 = pneg %p275
        $region86: #{tpu_custom_call.1} parent=83 // pred_check_branch
          %1923 = sbr.rel (%p1921) target = $region88
        $region87: #{tpu_custom_call.1} parent=83 // pred_region
          %s1924 = sand.u32 %s260, 1
          %s1925 = scalar_lea.sflag [#allocation4], %s1924
          %s1926 = sand.u32 %s260, 1
          %s1927 = smul.addr %s1926, 128
          %s1928 = scalar_lea.vmem [#allocation8], %s1927
          %1929 = dma.done %s1925, 2048
        $region88: #{tpu_custom_call.1} parent=83 // pred_fallthru
          _
        // Predicated region
        $region89: #{tpu_custom_call.1} parent=83 // pred_check
          %p1930 = pneg %p301
        $region90: #{tpu_custom_call.1} parent=83 // pred_check_branch
          %1932 = sbr.rel (%p1930) target = $region92
        $region91: #{tpu_custom_call.1} parent=83 // pred_region
          %s1933 = sand.u32 %s286, 1
          %s1934 = scalar_lea.sflag [#allocation10], %s1933
          %s1935 = sand.u32 %s286, 1
          %s1936 = smul.addr %s1935, 256
          %s1937 = scalar_lea.vmem [#allocation9], %s1936
          %1938 = dma.done %s1934, 4096
        $region92: #{tpu_custom_call.1} parent=83 // pred_fallthru
          _
      $region84: #{tpu_custom_call.1} parent=5 // pred_fallthru
        _
    $region6: #{tpu_custom_call.1} parent=1 // loop_footer
      %s30 = sadd.s32 1, %s26
    $region7: #{tpu_custom_call.1} parent=1 // loop_footer_branch
      %25 = sbr.rel target = $region3
    $region8: #{tpu_custom_call.1} parent=1 // loop_exit
      _
    %1939 = vsyncpa [#allocation3], 1
    %s1940 = scalar_lea.sflag [#allocation3], 1
    %1941 = vsyncpa %s1940, 1
    %1942 = vsyncpa [#allocation6], 1
    %1943 = vsyncpa [#allocation4], 1
    %s1944 = scalar_lea.sflag [#allocation4], 1
    %1945 = vsyncpa %s1944, 1
    %1946 = vsyncpa [#allocation10], 1
    %s1947 = scalar_lea.sflag [#allocation10], 1
    %1948 = vsyncpa %s1947, 1

</llo_original>
